<compile_context>
chip_gen: v7x
topology: tpu7x:2x2x1
jax: 0.10.0
libtpu: 0.0.40
codegen_flags: <defaults>
</compile_context>

<pallas_src>
import functools

import jax
import jax.numpy as jnp
from jax import lax
from jax.experimental import pallas as pl
from jax.experimental.pallas import tpu as pltpu

DEF_LABELS = ['non-SATD', 'code|design-debt', 'requirement-debt',
              'documentation-debt', 'test-debt']
NUM_TASKS = 4                   # len(DEF_MAPPING)
NUM_CLASSES = len(DEF_LABELS)   # 5


def textcnn_kernel(max_ks, L, x_ref, conv_w_ref, mask_ref, conv_b_ref,
                   fc_w_ref, fc_b_ref, out_ref):
    """Fused Kim-CNN multitask forward for one batch tile.

    x_ref      : (TB, S_pad, E)   bfloat16  (sequence pre-zero-padded in wrapper)
    conv_w_ref : (max_ks, E, n*K) bfloat16  (taps zero-padded to max_ks)
    mask_ref   : (L, n*K)         float32   additive validity mask (0 / -inf)
    conv_b_ref : (1, n*K)         float32
    fc_w_ref   : (n*K, T*C)       bfloat16
    fc_b_ref   : (1, T*C)         float32
    out_ref    : (TB, T*C)        float32
    """
    # Tap-decomposed conv: conv[b, l, c] = sum_i x[b, l+i, :] @ W_i[:, c]
    conv = None
    for i in range(max_ks):
        xi = x_ref[:, i:i + L, :]                           # (TB, L, E) bf16
        yi = lax.dot_general(
            xi, conv_w_ref[i],
            dimension_numbers=(((2,), (0,)), ((), ())),
            preferred_element_type=jnp.float32)             # (TB, L, n*K) f32
        conv = yi if conv is None else conv + yi

    # Window positions past each branch's valid conv length never win the max.
    conv = conv + mask_ref[...]

    # Global max-pool over time, THEN bias + ReLU (exact reorder).
    pooled = jnp.max(conv, axis=1)                          # (TB, n*K)
    feat = jnp.maximum(pooled + conv_b_ref[...], 0.0)       # (TB, n*K) f32

    # Dropout: eval-mode identity.

    # Fused multitask heads: one matmul, one contiguous store.
    out_ref[...] = (jnp.dot(feat.astype(fc_w_ref.dtype), fc_w_ref[...],
                            preferred_element_type=jnp.float32)
                    + fc_b_ref[...])


def _round_up(v, m):
    return ((v + m - 1) // m) * m


def textcnn_multitask_forward(x, conv_ws, conv_bs, fc_w, fc_b, kernel_sizes,
                              block_b=256):
    """Returns a list (one per task) of (B, NUM_CLASSES) logits."""
    B, S, E = x.shape
    T, C, F = fc_w.shape
    K = conv_ws[0].shape[0]
    n = len(kernel_sizes)
    max_ks = max(kernel_sizes)
    min_ks = min(kernel_sizes)
    assert F == n * K
    assert S >= max_ks, "sequence shorter than the largest kernel size"

    L = S - min_ks + 1                      # unified number of window positions

    # --- One-time HBM-side prep (hoisted out of the kernel) ---
    # Sequence zero-pad, rounded up to a multiple of 8 (sublane-friendly slices),
    # then cast the only streamed operand to bf16.
    S_pad = _round_up(S + (max_ks - min_ks), 8)
    x_pad = jnp.pad(x, ((0, 0), (0, S_pad - S), (0, 0))).astype(jnp.bfloat16)

    # Conv weights: (K, ks, E) -> (ks, E, K) -> zero-pad taps to max_ks, concat
    # branches along the output-channel axis -> (max_ks, E, n*K).
    packed = []
    for w, ks in zip(conv_ws, kernel_sizes):
        wt = jnp.transpose(w, (1, 2, 0))                    # (ks, E, K)
        if ks < max_ks:
            wt = jnp.pad(wt, ((0, max_ks - ks), (0, 0), (0, 0)))
        packed.append(wt)
    conv_w = jnp.concatenate(packed, axis=2).astype(jnp.bfloat16)
    conv_b = jnp.concatenate([b.reshape(1, K) for b in conv_bs],
                             axis=1).astype(jnp.float32)    # (1, n*K)

    # Additive validity mask: 0 where l < S - ks + 1, else -inf (per branch).
    pos = jnp.arange(L)[:, None]                            # (L, 1)
    cols = []
    for ks in kernel_sizes:
        valid = jnp.broadcast_to(pos < (S - ks + 1), (L, K))
        cols.append(jnp.where(valid, 0.0, -jnp.inf))
    mask = jnp.concatenate(cols, axis=1).astype(jnp.float32)  # (L, n*K)

    # Heads: (T, C, F) -> (F, T*C), biases -> (1, T*C).
    fc_w_t = (jnp.transpose(fc_w, (2, 0, 1)).reshape(F, T * C)
              .astype(jnp.bfloat16))
    fc_b_t = fc_b.reshape(1, T * C).astype(jnp.float32)

    # --- Batch tiling ---
    # For B >= 16 aim for >= 2 grid steps (keeps both v7x TensorCores busy),
    # sublane-aligned, capped at block_b (VMEM-safe across generations).
    if B >= 16:
        TB = min(block_b, _round_up(pl.cdiv(B, 2), 8))
    else:
        TB = B
    grid = (pl.cdiv(B, TB),)

    def const_spec(a):
        nd = a.ndim
        return pl.BlockSpec(a.shape, lambda b, _nd=nd: (0,) * _nd)

    kernel = functools.partial(textcnn_kernel, max_ks, L)

    out = pl.pallas_call(
        kernel,
        out_shape=jax.ShapeDtypeStruct((B, T * C), jnp.float32),
        grid=grid,
        in_specs=[pl.BlockSpec((TB, S_pad, E), lambda b: (b, 0, 0)),
                  const_spec(conv_w),
                  const_spec(mask),
                  const_spec(conv_b),
                  const_spec(fc_w_t),
                  const_spec(fc_b_t)],
        out_specs=pl.BlockSpec((TB, T * C), lambda b: (b, 0)),
        compiler_params=pltpu.CompilerParams(
            dimension_semantics=("parallel",)),
    )(x_pad, conv_w, mask, conv_b, fc_w_t, fc_b_t)

    out = out.reshape(B, T, C)
    return [out[:, t, :] for t in range(T)]


def reference_forward(x, conv_ws, conv_bs, fc_w, fc_b, kernel_sizes):
    """Pure-JAX f32 reference mirroring the PyTorch forward (eval mode)."""
    B, S, E = x.shape
    pooled = []
    for w, b, ks in zip(conv_ws, conv_bs, kernel_sizes):
        L = S - ks + 1
        windows = jnp.stack([x[:, i:i + L, :] for i in range(ks)], axis=2)
        conv = jnp.einsum('blie,kie->blk', windows, w) + b[0][None, None, :]
        conv = jnp.maximum(conv, 0.0)
        pooled.append(jnp.max(conv, axis=1))                     # (B, K)
    feat = jnp.concatenate(pooled, axis=1)
    return [feat @ fc_w[t].T + fc_b[t][None, :] for t in range(fc_w.shape[0])]


if __name__ == "__main__":
    # Small shapes consistent with the module's forward:
    #   params.kernel_sizes = (3, 4, 5), params.kernel_num = 8, embed_dim = 32
    B, S, E = 2, 16, 32
    kernel_sizes = (3, 4, 5)
    kernel_num = 8
    feat_dim = len(kernel_sizes) * kernel_num   # 24

    key = jax.random.PRNGKey(0)
    keys = jax.random.split(key, 2 * len(kernel_sizes) + 3)

    x = jax.random.normal(keys[0], (B, S, E), dtype=jnp.float32)

    conv_ws = []
    conv_bs = []
    for i, ks in enumerate(kernel_sizes):
        # PyTorch Conv2d weight is (K, 1, ks, E); channel dim (=1) dropped here.
        conv_ws.append(0.1 * jax.random.normal(keys[1 + 2 * i],
                                               (kernel_num, ks, E),
                                               dtype=jnp.float32))
        conv_bs.append(0.1 * jax.random.normal(keys[2 + 2 * i],
                                               (1, kernel_num),
                                               dtype=jnp.float32))

    fc_w = 0.1 * jax.random.normal(keys[-2], (NUM_TASKS, NUM_CLASSES, feat_dim),
                                   dtype=jnp.float32)
    fc_b = 0.1 * jax.random.normal(keys[-1], (NUM_TASKS, NUM_CLASSES),
                                   dtype=jnp.float32)

    logits = textcnn_multitask_forward(x, conv_ws, conv_bs, fc_w, fc_b,
                                       kernel_sizes)
    logits = [jax.block_until_ready(l) for l in logits]

    ref = reference_forward(x, conv_ws, conv_bs, fc_w, fc_b, kernel_sizes)
    for got, want in zip(logits, ref):
        assert got.shape == (B, NUM_CLASSES)
        # bf16 inputs/weights -> looser tolerance than the f32 reference.
        assert jnp.allclose(got, want, atol=5e-2, rtol=5e-2), \
            "mismatch vs reference"

    print("KERNEL_OK")
</pallas_src>

<mosaic_0001>
module attributes {stable_mosaic.version = 11 : i64} {
  func.func @textcnn_kernel(%arg0: i32, %arg1: memref<2x24x32xbf16, #tpu.memory_space<vmem>>, %arg2: memref<5x32x24xbf16, #tpu.memory_space<vmem>>, %arg3: memref<14x24xf32, #tpu.memory_space<vmem>>, %arg4: memref<1x24xf32, #tpu.memory_space<vmem>>, %arg5: memref<24x20xbf16, #tpu.memory_space<vmem>>, %arg6: memref<1x20xf32, #tpu.memory_space<vmem>>, %arg7: memref<2x20xf32, #tpu.memory_space<vmem>>) attributes {dimension_semantics = [#tpu.dimension_semantics<parallel>], iteration_bounds = array<i64: 1>, scalar_prefetch = 0 : i64, scratch_operands = 0 : i64, tpu.core_type = #tpu.core_type<tc>, window_params = [{transform_indices = @transform_0, window_bounds = array<i64: 2, 24, 32>}, {pipeline_mode = #tpu.pipeline_mode<synchronous>, transform_indices = @transform_1, window_bounds = array<i64: 5, 32, 24>}, {pipeline_mode = #tpu.pipeline_mode<synchronous>, transform_indices = @transform_2, window_bounds = array<i64: 14, 24>}, {pipeline_mode = #tpu.pipeline_mode<synchronous>, transform_indices = @transform_3, window_bounds = array<i64: 1, 24>}, {pipeline_mode = #tpu.pipeline_mode<synchronous>, transform_indices = @transform_4, window_bounds = array<i64: 24, 20>}, {pipeline_mode = #tpu.pipeline_mode<synchronous>, transform_indices = @transform_5, window_bounds = array<i64: 1, 20>}, {transform_indices = @transform_6, window_bounds = array<i64: 2, 20>}]} {
    %c0 = arith.constant 0 : index
    %c0_0 = arith.constant 0 : index
    %c0_1 = arith.constant 0 : index
    %0 = vector.load %arg1[%c0, %c0_0, %c0_1] : memref<2x24x32xbf16, #tpu.memory_space<vmem>>, vector<2x14x32xbf16>
    %c0_2 = arith.constant 0 : index
    %c0_3 = arith.constant 0 : index
    %c0_4 = arith.constant 0 : index
    %1 = vector.load %arg2[%c0_2, %c0_3, %c0_4] : memref<5x32x24xbf16, #tpu.memory_space<vmem>>, vector<1x32x24xbf16>
    %2 = vector.shape_cast %1 : vector<1x32x24xbf16> to vector<32x24xbf16>
    %cst = arith.constant dense<0.000000e+00> : vector<2x14x24xf32>
    %3 = tpu.matmul %0, %2, %cst {dimension_numbers = #tpu.dot_dimension_numbers<[2], [0], [0, 1], [1], [0, 0, 0, 1, 1, 1], [], []>} : vector<2x14x32xbf16>, vector<32x24xbf16>, vector<2x14x24xf32> -> vector<2x14x24xf32>
    %c0_5 = arith.constant 0 : index
    %c1 = arith.constant 1 : index
    %c0_6 = arith.constant 0 : index
    %4 = vector.load %arg1[%c0_5, %c1, %c0_6] : memref<2x24x32xbf16, #tpu.memory_space<vmem>>, vector<2x14x32xbf16>
    %c1_7 = arith.constant 1 : index
    %c0_8 = arith.constant 0 : index
    %c0_9 = arith.constant 0 : index
    %5 = vector.load %arg2[%c1_7, %c0_8, %c0_9] : memref<5x32x24xbf16, #tpu.memory_space<vmem>>, vector<1x32x24xbf16>
    %6 = vector.shape_cast %5 : vector<1x32x24xbf16> to vector<32x24xbf16>
    %cst_10 = arith.constant dense<0.000000e+00> : vector<2x14x24xf32>
    %7 = tpu.matmul %4, %6, %cst_10 {dimension_numbers = #tpu.dot_dimension_numbers<[2], [0], [0, 1], [1], [0, 0, 0, 1, 1, 1], [], []>} : vector<2x14x32xbf16>, vector<32x24xbf16>, vector<2x14x24xf32> -> vector<2x14x24xf32>
    %8 = arith.addf %3, %7 : vector<2x14x24xf32>
    %c0_11 = arith.constant 0 : index
    %c2 = arith.constant 2 : index
    %c0_12 = arith.constant 0 : index
    %9 = vector.load %arg1[%c0_11, %c2, %c0_12] : memref<2x24x32xbf16, #tpu.memory_space<vmem>>, vector<2x14x32xbf16>
    %c2_13 = arith.constant 2 : index
    %c0_14 = arith.constant 0 : index
    %c0_15 = arith.constant 0 : index
    %10 = vector.load %arg2[%c2_13, %c0_14, %c0_15] : memref<5x32x24xbf16, #tpu.memory_space<vmem>>, vector<1x32x24xbf16>
    %11 = vector.shape_cast %10 : vector<1x32x24xbf16> to vector<32x24xbf16>
    %cst_16 = arith.constant dense<0.000000e+00> : vector<2x14x24xf32>
    %12 = tpu.matmul %9, %11, %cst_16 {dimension_numbers = #tpu.dot_dimension_numbers<[2], [0], [0, 1], [1], [0, 0, 0, 1, 1, 1], [], []>} : vector<2x14x32xbf16>, vector<32x24xbf16>, vector<2x14x24xf32> -> vector<2x14x24xf32>
    %13 = arith.addf %8, %12 : vector<2x14x24xf32>
    %c0_17 = arith.constant 0 : index
    %c3 = arith.constant 3 : index
    %c0_18 = arith.constant 0 : index
    %14 = vector.load %arg1[%c0_17, %c3, %c0_18] : memref<2x24x32xbf16, #tpu.memory_space<vmem>>, vector<2x14x32xbf16>
    %c3_19 = arith.constant 3 : index
    %c0_20 = arith.constant 0 : index
    %c0_21 = arith.constant 0 : index
    %15 = vector.load %arg2[%c3_19, %c0_20, %c0_21] : memref<5x32x24xbf16, #tpu.memory_space<vmem>>, vector<1x32x24xbf16>
    %16 = vector.shape_cast %15 : vector<1x32x24xbf16> to vector<32x24xbf16>
    %cst_22 = arith.constant dense<0.000000e+00> : vector<2x14x24xf32>
    %17 = tpu.matmul %14, %16, %cst_22 {dimension_numbers = #tpu.dot_dimension_numbers<[2], [0], [0, 1], [1], [0, 0, 0, 1, 1, 1], [], []>} : vector<2x14x32xbf16>, vector<32x24xbf16>, vector<2x14x24xf32> -> vector<2x14x24xf32>
    %18 = arith.addf %13, %17 : vector<2x14x24xf32>
    %c0_23 = arith.constant 0 : index
    %c4 = arith.constant 4 : index
    %c0_24 = arith.constant 0 : index
    %19 = vector.load %arg1[%c0_23, %c4, %c0_24] : memref<2x24x32xbf16, #tpu.memory_space<vmem>>, vector<2x14x32xbf16>
    %c4_25 = arith.constant 4 : index
    %c0_26 = arith.constant 0 : index
    %c0_27 = arith.constant 0 : index
    %20 = vector.load %arg2[%c4_25, %c0_26, %c0_27] : memref<5x32x24xbf16, #tpu.memory_space<vmem>>, vector<1x32x24xbf16>
    %21 = vector.shape_cast %20 : vector<1x32x24xbf16> to vector<32x24xbf16>
    %cst_28 = arith.constant dense<0.000000e+00> : vector<2x14x24xf32>
    %22 = tpu.matmul %19, %21, %cst_28 {dimension_numbers = #tpu.dot_dimension_numbers<[2], [0], [0, 1], [1], [0, 0, 0, 1, 1, 1], [], []>} : vector<2x14x32xbf16>, vector<32x24xbf16>, vector<2x14x24xf32> -> vector<2x14x24xf32>
    %23 = arith.addf %18, %22 : vector<2x14x24xf32>
    %c0_29 = arith.constant 0 : index
    %c0_30 = arith.constant 0 : index
    %24 = vector.load %arg3[%c0_29, %c0_30] : memref<14x24xf32, #tpu.memory_space<vmem>>, vector<14x24xf32>
    %25 = vector.shape_cast %24 : vector<14x24xf32> to vector<1x14x24xf32>
    %26 = vector.broadcast %25 : vector<1x14x24xf32> to vector<2x14x24xf32>
    %27 = arith.addf %23, %26 : vector<2x14x24xf32>
    %cst_31 = arith.constant dense<0xFF800000> : vector<2x24xf32>
    %28 = vector.multi_reduction <maximumf>, %27, %cst_31 [1] : vector<2x14x24xf32> to vector<2x24xf32>
    %c0_32 = arith.constant 0 : index
    %c0_33 = arith.constant 0 : index
    %29 = vector.load %arg4[%c0_32, %c0_33] : memref<1x24xf32, #tpu.memory_space<vmem>>, vector<1x24xf32>
    %30 = vector.broadcast %29 : vector<1x24xf32> to vector<2x24xf32>
    %31 = arith.addf %28, %30 : vector<2x24xf32>
    %cst_34 = arith.constant 0.000000e+00 : f32
    %32 = vector.broadcast %cst_34 : f32 to vector<2x24xf32>
    %33 = arith.maximumf %31, %32 : vector<2x24xf32>
    %34 = arith.truncf %33 : vector<2x24xf32> to vector<2x24xbf16>
    %c0_35 = arith.constant 0 : index
    %c0_36 = arith.constant 0 : index
    %35 = vector.load %arg5[%c0_35, %c0_36] : memref<24x20xbf16, #tpu.memory_space<vmem>>, vector<24x20xbf16>
    %cst_37 = arith.constant dense<0.000000e+00> : vector<2x20xf32>
    %36 = tpu.matmul %34, %35, %cst_37 {dimension_numbers = #tpu.dot_dimension_numbers<[1], [0], [0], [1], [0, 0, 1, 1], [], []>} : vector<2x24xbf16>, vector<24x20xbf16>, vector<2x20xf32> -> vector<2x20xf32>
    %c0_38 = arith.constant 0 : index
    %c0_39 = arith.constant 0 : index
    %37 = vector.load %arg6[%c0_38, %c0_39] : memref<1x20xf32, #tpu.memory_space<vmem>>, vector<1x20xf32>
    %38 = vector.broadcast %37 : vector<1x20xf32> to vector<2x20xf32>
    %39 = arith.addf %36, %38 : vector<2x20xf32>
    %c0_40 = arith.constant 0 : index
    %c0_41 = arith.constant 0 : index
    %40 = vector.load %arg7[%c0_40, %c0_41] : memref<2x20xf32, #tpu.memory_space<vmem>>, vector<2x20xf32>
    tpu.vector_store %arg7[%c0_40, %c0_41], %39 {strides = array<i32>} : memref<2x20xf32, #tpu.memory_space<vmem>>, vector<2x20xf32>,
    return
  }
  func.func @transform_0(%arg0: i32) -> (i32, i32, i32) {
    %c0_i32 = arith.constant 0 : i32
    %c0_i32_0 = arith.constant 0 : i32
    %c0_i32_1 = arith.constant 0 : i32
    return %arg0, %c0_i32, %c0_i32_0 : i32, i32, i32
  }
  func.func @transform_1(%arg0: i32) -> (i32, i32, i32) {
    %c0_i32 = arith.constant 0 : i32
    %c0_i32_0 = arith.constant 0 : i32
    %c0_i32_1 = arith.constant 0 : i32
    %c0_i32_2 = arith.constant 0 : i32
    return %c0_i32, %c0_i32_0, %c0_i32_1 : i32, i32, i32
  }
  func.func @transform_2(%arg0: i32) -> (i32, i32) {
    %c0_i32 = arith.constant 0 : i32
    %c0_i32_0 = arith.constant 0 : i32
    %c0_i32_1 = arith.constant 0 : i32
    return %c0_i32, %c0_i32_0 : i32, i32
  }
  func.func @transform_3(%arg0: i32) -> (i32, i32) {
    %c0_i32 = arith.constant 0 : i32
    %c0_i32_0 = arith.constant 0 : i32
    %c0_i32_1 = arith.constant 0 : i32
    return %c0_i32, %c0_i32_0 : i32, i32
  }
  func.func @transform_4(%arg0: i32) -> (i32, i32) {
    %c0_i32 = arith.constant 0 : i32
    %c0_i32_0 = arith.constant 0 : i32
    %c0_i32_1 = arith.constant 0 : i32
    return %c0_i32, %c0_i32_0 : i32, i32
  }
  func.func @transform_5(%arg0: i32) -> (i32, i32) {
    %c0_i32 = arith.constant 0 : i32
    %c0_i32_0 = arith.constant 0 : i32
    %c0_i32_1 = arith.constant 0 : i32
    return %c0_i32, %c0_i32_0 : i32, i32
  }
  func.func @transform_6(%arg0: i32) -> (i32, i32) {
    %c0_i32 = arith.constant 0 : i32
    %c0_i32_0 = arith.constant 0 : i32
    return %arg0, %c0_i32 : i32, i32
  }
}

</mosaic_0001>

<llo_original>
// kernel: tpu_custom_call.1
$region0: #{tpu_custom_call.1}
  #allocation0 [shape = 'u32[]', space=smem, size = 0x4, offset = 0x4, fixed_abs, tag = 'smem constant byte address 0x4 - core index']
  #allocation1 [shape = 'u32[144,128]{1,0:T(1,128)}', space=vmem, size = 0x12000, scoped, tag = 'internal scratch']
  %s0 = inlined_call_operand.vmem [shape: bf16[2,24,32], index: 0, kind: input, shape index: {}]
  %s1 = inlined_call_operand.vmem [shape: bf16[5,32,24], index: 1, kind: input, shape index: {}]
  %s2 = inlined_call_operand.vmem [shape: f32[14,24], index: 2, kind: input, shape index: {}]
  %s3 = inlined_call_operand.vmem [shape: f32[1,24], index: 3, kind: input, shape index: {}]
  %s4 = inlined_call_operand.vmem [shape: bf16[24,20], index: 4, kind: input, shape index: {}]
  %s5 = inlined_call_operand.vmem [shape: f32[1,20], index: 5, kind: input, shape index: {}]
  %s6 = inlined_call_operand.hbm [shape: f32[2,20], index: 6, kind: output, shape index: {}]
  %s7 = sld [smem:[#allocation0]]
  $region34: #{tpu_custom_call.1} parent=0
    _
  %s9 = ssub.s32 1, %s7
  %s10 = scalar_select 0, %s9, %s7
  $region1: #{tpu_custom_call.1} parent=0
    #allocation2 [shape = 'u8[1024]{0}', space=vmem, size = 0x400, scoped, tag = 'output window, operand 0, single buffered']
    #allocation3 [shape = 's32[1]{0}', space=sflag, size = 0x4, scoped, tag = 'scoped memory for tpu_custom_call.1']
    %11 = vsyncpa [#allocation3], 0
    // Predicated region
    $region2: #{tpu_custom_call.1} parent=1 // pred_check
      _
    $region3: #{tpu_custom_call.1} parent=1 // pred_check_branch
      %13 = sbr.rel (0) target = $region5
    $region4: #{tpu_custom_call.1} parent=1 // pred_region
      _
    $region5: #{tpu_custom_call.1} parent=1 // pred_fallthru
      _
    // Predicated region
    $region6: #{tpu_custom_call.1} parent=1 // pred_check
      _
    $region7: #{tpu_custom_call.1} parent=1 // pred_check_branch
      %15 = sbr.rel (0) target = $region9
    $region8: #{tpu_custom_call.1} parent=1 // pred_region
      _
    $region9: #{tpu_custom_call.1} parent=1 // pred_fallthru
      _
    // Predicated region
    $region10: #{tpu_custom_call.1} parent=1 // pred_check
      _
    $region11: #{tpu_custom_call.1} parent=1 // pred_check_branch
      %17 = sbr.rel (0) target = $region13
    $region12: #{tpu_custom_call.1} parent=1 // pred_region
      _
    $region13: #{tpu_custom_call.1} parent=1 // pred_fallthru
      _
    // Predicated region
    $region14: #{tpu_custom_call.1} parent=1 // pred_check
      _
    $region15: #{tpu_custom_call.1} parent=1 // pred_check_branch
      %19 = sbr.rel (0) target = $region17
    $region16: #{tpu_custom_call.1} parent=1 // pred_region
      _
    $region17: #{tpu_custom_call.1} parent=1 // pred_fallthru
      _
    // Predicated region
    $region18: #{tpu_custom_call.1} parent=1 // pred_check
      _
    $region19: #{tpu_custom_call.1} parent=1 // pred_check_branch
      %21 = sbr.rel (0) target = $region21
    $region20: #{tpu_custom_call.1} parent=1 // pred_region
      _
    $region21: #{tpu_custom_call.1} parent=1 // pred_fallthru
      _
    // Predicated region
    $region22: #{tpu_custom_call.1} parent=1 // pred_check
      _
    $region23: #{tpu_custom_call.1} parent=1 // pred_check_branch
      %23 = sbr.rel (0) target = $region25
    $region24: #{tpu_custom_call.1} parent=1 // pred_region
      _
    $region25: #{tpu_custom_call.1} parent=1 // pred_fallthru
      _
    %v25 = vld [vmem:[%s0] sm:$0xf]
    %v26 = vld [vmem:[%s0 + $0x4] sm:$0x7]
    %v27 = vld [vmem:[%s0 + $0xc] sm:$0xf]
    %v28 = vld [vmem:[%s0 + $0x10] sm:$0x7]
    %v29 = vld [vmem:[%s1] sm:$0xf]
    %v30 = vld [vmem:[%s1 + $0x4] sm:$0xf]
    %v31 = vld [vmem:[%s1 + $0x8] sm:$0xf]
    %v32 = vld [vmem:[%s1 + $0xc] sm:$0xf]
    %v33 = vld [vmem:[%s0 + $0x4] sm:$0xf]
    %v34 = vld [vmem:[%s0 + $0x10] sm:$0xf]
    %s35 = scalar_lea.vmem %s1, 16
    %v36 = vld [vmem:[%s35] sm:$0xf]
    %v37 = vld [vmem:[%s35 + $0x4] sm:$0xf]
    %v38 = vld [vmem:[%s35 + $0x8] sm:$0xf]
    %v39 = vld [vmem:[%s35 + $0xc] sm:$0xf]
    %v45 = vunpack.c.l.s4 1966171168
    %v46 = vunpack.c.0.s8 %v45
    %v47 = vlaneseq
    %v48 = vshrl.u32 %v47, 7
    %v49 = vsub.s32 %v46, %v48
    %v50 = vrot.slane %v25, %v49
    %v51 = vcombine.high %v50, %v50
    %v53 = vunpack.c.l.s4 1966171168
    %v54 = vunpack.c.0.s8 %v53
    %v55 = vlaneseq
    %v56 = vshrl.u32 %v55, 7
    %v57 = vsub.s32 %v54, %v56
    %v58 = vrot.slane %v50, %v57
    %v60 = vunpack.c.l.s4 1966171168
    %v61 = vunpack.c.0.s8 %v60
    %v62 = vlaneseq
    %v63 = vshrl.u32 %v62, 7
    %v64 = vsub.s32 %v61, %v63
    %v65 = vrot.slane %v51, %v64
    %v66 = vcombine.high %v58, %v58
    %v67 = vcombine.high %v65, %v65
    %v69 = vunpack.c.l.s4 1966171168
    %v70 = vunpack.c.0.s8 %v69
    %v71 = vlaneseq
    %v72 = vshrl.u32 %v71, 7
    %v73 = vsub.s32 %v70, %v72
    %v74 = vrot.slane %v33, %v73
    %v75 = vcombine.high %v74, %v74
    %v77 = vunpack.c.l.s4 1966171168
    %v78 = vunpack.c.0.s8 %v77
    %v79 = vlaneseq
    %v80 = vshrl.u32 %v79, 7
    %v81 = vsub.s32 %v78, %v80
    %v82 = vrot.slane %v74, %v81
    %v84 = vunpack.c.l.s4 1966171168
    %v85 = vunpack.c.0.s8 %v84
    %v86 = vlaneseq
    %v87 = vshrl.u32 %v86, 7
    %v88 = vsub.s32 %v85, %v87
    %v89 = vrot.slane %v75, %v88
    %v90 = vcombine.high %v82, %v82
    %v91 = vcombine.high %v89, %v89
    %v93 = vunpack.c.l.s4 1966171168
    %v94 = vunpack.c.0.s8 %v93
    %v95 = vlaneseq
    %v96 = vshrl.u32 %v95, 7
    %v97 = vsub.s32 %v94, %v96
    %v98 = vrot.slane %v27, %v97
    %v99 = vcombine.high %v98, %v98
    %v101 = vunpack.c.l.s4 1966171168
    %v102 = vunpack.c.0.s8 %v101
    %v103 = vlaneseq
    %v104 = vshrl.u32 %v103, 7
    %v105 = vsub.s32 %v102, %v104
    %v106 = vrot.slane %v98, %v105
    %v108 = vunpack.c.l.s4 1966171168
    %v109 = vunpack.c.0.s8 %v108
    %v110 = vlaneseq
    %v111 = vshrl.u32 %v110, 7
    %v112 = vsub.s32 %v109, %v111
    %v113 = vrot.slane %v99, %v112
    %v114 = vcombine.high %v106, %v106
    %v115 = vcombine.high %v113, %v113
    %v117 = vunpack.c.l.s4 1966171168
    %v118 = vunpack.c.0.s8 %v117
    %v119 = vlaneseq
    %v120 = vshrl.u32 %v119, 7
    %v121 = vsub.s32 %v118, %v120
    %v122 = vrot.slane %v34, %v121
    %v123 = vcombine.high %v122, %v122
    %v125 = vunpack.c.l.s4 1966171168
    %v126 = vunpack.c.0.s8 %v125
    %v127 = vlaneseq
    %v128 = vshrl.u32 %v127, 7
    %v129 = vsub.s32 %v126, %v128
    %v130 = vrot.slane %v122, %v129
    %v132 = vunpack.c.l.s4 1966171168
    %v133 = vunpack.c.0.s8 %v132
    %v134 = vlaneseq
    %v135 = vshrl.u32 %v134, 7
    %v136 = vsub.s32 %v133, %v135
    %v137 = vrot.slane %v123, %v136
    %v138 = vcombine.high %v130, %v130
    %v139 = vcombine.high %v137, %v137
    %vm140 = vsmask.f32 256
    %vm141 = vsmask.f32 1284
    %vm142 = vmor %vm140, %vm141
    %vm143 = vsmask.f32 2312
    %vm144 = vmor %vm142, %vm143
    %vm145 = vsmask.f32 3340
    %vm146 = vmor %vm144, %vm145
    %vm147 = vsmask.f32 4368
    %vm148 = vmor %vm146, %vm147
    %vm149 = vsmask.f32 5396
    %vm150 = vmor %vm148, %vm149
    %vm151 = vsmask.f32 6424
    %vm152 = vmor %vm150, %vm151
    %vm153 = vsmask.f32 7452
    %vm154 = vmor %vm152, %vm153
    %v156 = vshrl.u32 %v58, 16
    %v158 = vrot.slane %v156, 7
    %v159 = vrot.slane %v158, 1
    %v161 = vshll.u32 %v65, 16
    %v163 = vsel %vm154, %v159, %v161
    %v164 = vshrl.u32 %v65, 16
    %v166 = vrot.slane %v164, 7
    %v167 = vrot.slane %v166, 1
    %v169 = vshll.u32 %v66, 16
    %v171 = vsel %vm154, %v167, %v169
    %v172 = vshrl.u32 %v66, 16
    %v174 = vrot.slane %v172, 7
    %v175 = vrot.slane %v174, 1
    %v177 = vshll.u32 %v67, 16
    %v179 = vsel %vm154, %v175, %v177
    %v180 = vshrl.u32 %v67, 16
    %v182 = vrot.slane %v180, 7
    %v183 = vrot.slane %v182, 1
    %v185 = vshll.u32 %v82, 16
    %v187 = vsel %vm154, %v183, %v185
    %v188 = vshrl.u32 %v82, 16
    %v190 = vrot.slane %v188, 7
    %v191 = vrot.slane %v190, 1
    %v193 = vshll.u32 %v89, 16
    %v195 = vsel %vm154, %v191, %v193
    %v196 = vshrl.u32 %v89, 16
    %v198 = vrot.slane %v196, 7
    %v199 = vrot.slane %v198, 1
    %v201 = vshll.u32 %v90, 16
    %v203 = vsel %vm154, %v199, %v201
    %v204 = vshrl.u32 %v90, 16
    %v206 = vrot.slane %v204, 7
    %v207 = vrot.slane %v206, 1
    %v209 = vshll.u32 %v91, 16
    %v211 = vsel %vm154, %v207, %v209
    %v213 = vshrl.u32 %v106, 16
    %v215 = vrot.slane %v213, 7
    %v216 = vrot.slane %v215, 1
    %v218 = vshll.u32 %v113, 16
    %v220 = vsel %vm154, %v216, %v218
    %v221 = vshrl.u32 %v113, 16
    %v223 = vrot.slane %v221, 7
    %v224 = vrot.slane %v223, 1
    %v226 = vshll.u32 %v114, 16
    %v228 = vsel %vm154, %v224, %v226
    %v229 = vshrl.u32 %v114, 16
    %v231 = vrot.slane %v229, 7
    %v232 = vrot.slane %v231, 1
    %v234 = vshll.u32 %v115, 16
    %v236 = vsel %vm154, %v232, %v234
    %v237 = vshrl.u32 %v115, 16
    %v239 = vrot.slane %v237, 7
    %v240 = vrot.slane %v239, 1
    %v242 = vshll.u32 %v130, 16
    %v244 = vsel %vm154, %v240, %v242
    %v245 = vshrl.u32 %v130, 16
    %v247 = vrot.slane %v245, 7
    %v248 = vrot.slane %v247, 1
    %v250 = vshll.u32 %v137, 16
    %v252 = vsel %vm154, %v248, %v250
    %v253 = vshrl.u32 %v137, 16
    %v255 = vrot.slane %v253, 7
    %v256 = vrot.slane %v255, 1
    %v258 = vshll.u32 %v138, 16
    %v260 = vsel %vm154, %v256, %v258
    %v261 = vshrl.u32 %v138, 16
    %v263 = vrot.slane %v261, 7
    %v264 = vrot.slane %v263, 1
    %v266 = vshll.u32 %v139, 16
    %v268 = vsel %vm154, %v264, %v266
    %v269 = vcombine.low %v163, %v171
    %v270 = vcombine.low %v179, %v187
    %v271 = vcombine.low %v195, %v203
    %v272 = vcombine.low %v211, %v220
    %v274 = vunpack.c.l.s4 1966171168
    %v275 = vunpack.c.0.s8 %v274
    %v276 = vlaneseq
    %v277 = vshrl.u32 %v276, 7
    %v278 = vsub.s32 %v275, %v277
    %v279 = vrot.slane %v269, %v278
    %v281 = vunpack.c.l.s4 1966171168
    %v282 = vunpack.c.0.s8 %v281
    %v283 = vlaneseq
    %v284 = vshrl.u32 %v283, 7
    %v285 = vsub.s32 %v282, %v284
    %v286 = vrot.slane %v270, %v285
    %v288 = vunpack.c.l.s4 1966171168
    %v289 = vunpack.c.0.s8 %v288
    %v290 = vlaneseq
    %v291 = vshrl.u32 %v290, 7
    %v292 = vsub.s32 %v289, %v291
    %v293 = vrot.slane %v271, %v292
    %v295 = vunpack.c.l.s4 1966171168
    %v296 = vunpack.c.0.s8 %v295
    %v297 = vlaneseq
    %v298 = vshrl.u32 %v297, 7
    %v299 = vsub.s32 %v296, %v298
    %v300 = vrot.slane %v272, %v299
    %v301 = vcombine.low %v279, %v286
    %v302 = vcombine.low %v293, %v300
    %v304 = vunpack.c.l.s4 1966171168
    %v305 = vunpack.c.0.s8 %v304
    %v306 = vlaneseq
    %v307 = vshrl.u32 %v306, 7
    %v308 = vsub.s32 %v305, %v307
    %v309 = vrot.slane %v301, %v308
    %v311 = vunpack.c.l.s4 1966171168
    %v312 = vunpack.c.0.s8 %v311
    %v313 = vlaneseq
    %v314 = vshrl.u32 %v313, 7
    %v315 = vsub.s32 %v312, %v314
    %v316 = vrot.slane %v302, %v315
    %v317 = vcombine.low %v309, %v316
    %v318 = vcombine.low %v228, %v236
    %v319 = vcombine.low %v244, %v252
    %v320 = vcombine.low %v260, %v268
    %v322 = vunpack.c.l.s4 1966171168
    %v323 = vunpack.c.0.s8 %v322
    %v324 = vlaneseq
    %v325 = vshrl.u32 %v324, 7
    %v326 = vsub.s32 %v323, %v325
    %v327 = vrot.slane %v318, %v326
    %v329 = vunpack.c.l.s4 1966171168
    %v330 = vunpack.c.0.s8 %v329
    %v331 = vlaneseq
    %v332 = vshrl.u32 %v331, 7
    %v333 = vsub.s32 %v330, %v332
    %v334 = vrot.slane %v319, %v333
    %v336 = vunpack.c.l.s4 1966171168
    %v337 = vunpack.c.0.s8 %v336
    %v338 = vlaneseq
    %v339 = vshrl.u32 %v338, 7
    %v340 = vsub.s32 %v337, %v339
    %v341 = vrot.slane %v320, %v340
    %v342 = vcombine.low %v327, %v334
    %v344 = vunpack.c.l.s4 1966171168
    %v345 = vunpack.c.0.s8 %v344
    %v346 = vlaneseq
    %v347 = vshrl.u32 %v346, 7
    %v348 = vsub.s32 %v345, %v347
    %v349 = vrot.slane %v342, %v348
    %v351 = vunpack.c.l.s4 1966171168
    %v352 = vunpack.c.0.s8 %v351
    %v353 = vlaneseq
    %v354 = vshrl.u32 %v353, 7
    %v355 = vsub.s32 %v352, %v354
    %v356 = vrot.slane %v341, %v355
    %v357 = vcombine.low %v349, %v356
    %v362 = vunpack.c.l.b16 %v36
    %v363 = vunpack.c.l.b16 %v37
    %v364 = vunpack.c.l.b16 %v38
    %v365 = vunpack.c.l.b16 %v39
    %v366 = vpack.c.b16 %v363, %v362
    %v367 = vpack.c.b16 %v365, %v364
    %vm370 = vcmask 261120
    %v372 = vsel %vm370, %v317, 0
    %v375 = vsel %vm370, %v357, 0
    %377 = vmatprep.subr.bf16.mxu0 0
    %378 = vmatpush1.bf16.msra.mxu0 %v366
    %379 = vmatprep.subr.bf16.mxu0 0
    %380 = vmatpush1.bf16.msra.mxu0 %v367
    %381 = vmatprep.subr.bf16.mxu0 0
    %382 = vmatpush1.bf16.msra.mxu0 0
    %383 = vmatprep.subr.bf16.mxu0 0
    %384 = vmatpush1.bf16.msra.mxu0 0
    %385 = vmatprep.subr.bf16.mxu0 0
    %386 = vmatpush1.bf16.msra.mxu0 0
    %387 = vmatprep.subr.bf16.mxu0 0
    %388 = vmatpush1.bf16.msra.mxu0 0
    %389 = vmatprep.subr.bf16.mxu0 0
    %390 = vmatpush1.bf16.msra.mxu0 0
    %391 = vmatprep.subr.bf16.mxu0 0
    %392 = vmatpush1.bf16.msra.mxu0 0
    %393 = vmatprep.subr.bf16.mxu0 0
    %394 = vmatpush1.bf16.msra.mxu0 0
    %395 = vmatprep.subr.bf16.mxu0 0
    %396 = vmatpush1.bf16.msra.mxu0 0
    %397 = vmatprep.subr.bf16.mxu0 0
    %398 = vmatpush1.bf16.msra.mxu0 0
    %399 = vmatprep.subr.bf16.mxu0 0
    %400 = vmatpush1.bf16.msra.mxu0 0
    %401 = vmatprep.subr.bf16.mxu0 0
    %402 = vmatpush1.bf16.msra.mxu0 0
    %403 = vmatprep.subr.bf16.mxu0 0
    %404 = vmatpush1.bf16.msra.mxu0 0
    %405 = vmatprep.subr.bf16.mxu0 0
    %406 = vmatpush1.bf16.msra.mxu0 0
    %407 = vmatprep.subr.bf16.mxu0 0
    %408 = vmatpush1.bf16.msra.mxu0 0
    %409 = vmatprep.mubr.bf16.mxu0 0
    %410 = vmatmul.mubr.bf16.gmra.mrb[0].mxu0 %v372
    %v411 = vpop.f32.mrb[0].mxu0
    %v412 = vadd.f32 0.0, %v411
    %v413 = vpop.f32.mrb[0].mxu0
    %v414 = vpop.f32.mrb[0].mxu0
    %v415 = vadd.f32 0.0, %v414
    %v416 = vpop.f32.mrb[0].mxu0
    %417 = vmatprep.mubr.bf16.mxu0 0
    %418 = vmatmul.mubr.bf16.gmra.mrb[0].mxu0 %v375
    %v419 = vpop.f32.mrb[0].mxu0
    %v420 = vadd.f32 0.0, %v419
    %v421 = vpop.f32.mrb[0].mxu0
    %v422 = vpop.f32.mrb[0].mxu0
    %v423 = vadd.f32 0.0, %v422
    %v424 = vpop.f32.mrb[0].mxu0
    %425 = vdwg.mxu0
    %v429 = vunpack.c.l.s4 1966171168
    %v430 = vunpack.c.0.s8 %v429
    %v431 = vlaneseq
    %v432 = vshrl.u32 %v431, 7
    %v433 = vsub.s32 %v430, %v432
    %v434 = vrot.slane %v26, %v433
    %v435 = vcombine.high %v434, %v434
    %v437 = vunpack.c.l.s4 1966171168
    %v438 = vunpack.c.0.s8 %v437
    %v439 = vlaneseq
    %v440 = vshrl.u32 %v439, 7
    %v441 = vsub.s32 %v438, %v440
    %v442 = vrot.slane %v434, %v441
    %v444 = vunpack.c.l.s4 1966171168
    %v445 = vunpack.c.0.s8 %v444
    %v446 = vlaneseq
    %v447 = vshrl.u32 %v446, 7
    %v448 = vsub.s32 %v445, %v447
    %v449 = vrot.slane %v435, %v448
    %v450 = vcombine.high %v442, %v442
    %v452 = vunpack.c.l.s4 1966171168
    %v453 = vunpack.c.0.s8 %v452
    %v454 = vlaneseq
    %v455 = vshrl.u32 %v454, 7
    %v456 = vsub.s32 %v453, %v455
    %v457 = vrot.slane %v28, %v456
    %v458 = vcombine.high %v457, %v457
    %v460 = vunpack.c.l.s4 1966171168
    %v461 = vunpack.c.0.s8 %v460
    %v462 = vlaneseq
    %v463 = vshrl.u32 %v462, 7
    %v464 = vsub.s32 %v461, %v463
    %v465 = vrot.slane %v457, %v464
    %v467 = vunpack.c.l.s4 1966171168
    %v468 = vunpack.c.0.s8 %v467
    %v469 = vlaneseq
    %v470 = vshrl.u32 %v469, 7
    %v471 = vsub.s32 %v468, %v470
    %v472 = vrot.slane %v458, %v471
    %v473 = vcombine.high %v465, %v465
    %v474 = vcombine.low %v58, %v65
    %v475 = vcombine.low %v66, %v67
    %v476 = vcombine.low %v442, %v449
    %v477 = vcombine.low %v450, %v106
    %v479 = vunpack.c.l.s4 1966171168
    %v480 = vunpack.c.0.s8 %v479
    %v481 = vlaneseq
    %v482 = vshrl.u32 %v481, 7
    %v483 = vsub.s32 %v480, %v482
    %v484 = vrot.slane %v474, %v483
    %v486 = vunpack.c.l.s4 1966171168
    %v487 = vunpack.c.0.s8 %v486
    %v488 = vlaneseq
    %v489 = vshrl.u32 %v488, 7
    %v490 = vsub.s32 %v487, %v489
    %v491 = vrot.slane %v475, %v490
    %v493 = vunpack.c.l.s4 1966171168
    %v494 = vunpack.c.0.s8 %v493
    %v495 = vlaneseq
    %v496 = vshrl.u32 %v495, 7
    %v497 = vsub.s32 %v494, %v496
    %v498 = vrot.slane %v476, %v497
    %v500 = vunpack.c.l.s4 1966171168
    %v501 = vunpack.c.0.s8 %v500
    %v502 = vlaneseq
    %v503 = vshrl.u32 %v502, 7
    %v504 = vsub.s32 %v501, %v503
    %v505 = vrot.slane %v477, %v504
    %v506 = vcombine.low %v484, %v491
    %v507 = vcombine.low %v498, %v505
    %v509 = vunpack.c.l.s4 1966171168
    %v510 = vunpack.c.0.s8 %v509
    %v511 = vlaneseq
    %v512 = vshrl.u32 %v511, 7
    %v513 = vsub.s32 %v510, %v512
    %v514 = vrot.slane %v506, %v513
    %v516 = vunpack.c.l.s4 1966171168
    %v517 = vunpack.c.0.s8 %v516
    %v518 = vlaneseq
    %v519 = vshrl.u32 %v518, 7
    %v520 = vsub.s32 %v517, %v519
    %v521 = vrot.slane %v507, %v520
    %v522 = vcombine.low %v514, %v521
    %v523 = vcombine.low %v113, %v114
    %v524 = vcombine.low %v115, %v465
    %v525 = vcombine.low %v472, %v473
    %v527 = vunpack.c.l.s4 1966171168
    %v528 = vunpack.c.0.s8 %v527
    %v529 = vlaneseq
    %v530 = vshrl.u32 %v529, 7
    %v531 = vsub.s32 %v528, %v530
    %v532 = vrot.slane %v523, %v531
    %v534 = vunpack.c.l.s4 1966171168
    %v535 = vunpack.c.0.s8 %v534
    %v536 = vlaneseq
    %v537 = vshrl.u32 %v536, 7
    %v538 = vsub.s32 %v535, %v537
    %v539 = vrot.slane %v524, %v538
    %v541 = vunpack.c.l.s4 1966171168
    %v542 = vunpack.c.0.s8 %v541
    %v543 = vlaneseq
    %v544 = vshrl.u32 %v543, 7
    %v545 = vsub.s32 %v542, %v544
    %v546 = vrot.slane %v525, %v545
    %v547 = vcombine.low %v532, %v539
    %v549 = vunpack.c.l.s4 1966171168
    %v550 = vunpack.c.0.s8 %v549
    %v551 = vlaneseq
    %v552 = vshrl.u32 %v551, 7
    %v553 = vsub.s32 %v550, %v552
    %v554 = vrot.slane %v547, %v553
    %v556 = vunpack.c.l.s4 1966171168
    %v557 = vunpack.c.0.s8 %v556
    %v558 = vlaneseq
    %v559 = vshrl.u32 %v558, 7
    %v560 = vsub.s32 %v557, %v559
    %v561 = vrot.slane %v546, %v560
    %v562 = vcombine.low %v554, %v561
    %v567 = vunpack.c.l.b16 %v29
    %v568 = vunpack.c.l.b16 %v30
    %v569 = vunpack.c.l.b16 %v31
    %v570 = vunpack.c.l.b16 %v32
    %v571 = vpack.c.b16 %v568, %v567
    %v572 = vpack.c.b16 %v570, %v569
    %v576 = vsel %vm370, %v522, 0
    %v579 = vsel %vm370, %v562, 0
    %581 = vmatprep.subr.bf16.mxu0 0
    %582 = vmatpush1.bf16.msra.mxu0 %v571
    %583 = vmatprep.subr.bf16.mxu0 0
    %584 = vmatpush1.bf16.msra.mxu0 %v572
    %585 = vmatprep.subr.bf16.mxu0 0
    %586 = vmatpush1.bf16.msra.mxu0 0
    %587 = vmatprep.subr.bf16.mxu0 0
    %588 = vmatpush1.bf16.msra.mxu0 0
    %589 = vmatprep.subr.bf16.mxu0 0
    %590 = vmatpush1.bf16.msra.mxu0 0
    %591 = vmatprep.subr.bf16.mxu0 0
    %592 = vmatpush1.bf16.msra.mxu0 0
    %593 = vmatprep.subr.bf16.mxu0 0
    %594 = vmatpush1.bf16.msra.mxu0 0
    %595 = vmatprep.subr.bf16.mxu0 0
    %596 = vmatpush1.bf16.msra.mxu0 0
    %597 = vmatprep.subr.bf16.mxu0 0
    %598 = vmatpush1.bf16.msra.mxu0 0
    %599 = vmatprep.subr.bf16.mxu0 0
    %600 = vmatpush1.bf16.msra.mxu0 0
    %601 = vmatprep.subr.bf16.mxu0 0
    %602 = vmatpush1.bf16.msra.mxu0 0
    %603 = vmatprep.subr.bf16.mxu0 0
    %604 = vmatpush1.bf16.msra.mxu0 0
    %605 = vmatprep.subr.bf16.mxu0 0
    %606 = vmatpush1.bf16.msra.mxu0 0
    %607 = vmatprep.subr.bf16.mxu0 0
    %608 = vmatpush1.bf16.msra.mxu0 0
    %609 = vmatprep.subr.bf16.mxu0 0
    %610 = vmatpush1.bf16.msra.mxu0 0
    %611 = vmatprep.subr.bf16.mxu0 0
    %612 = vmatpush1.bf16.msra.mxu0 0
    %613 = vmatprep.mubr.bf16.mxu0 0
    %614 = vmatmul.mubr.bf16.gmra.mrb[0].mxu0 %v576
    %v615 = vpop.f32.mrb[0].mxu0
    %v616 = vadd.f32 %v412, %v615
    %v617 = vpop.f32.mrb[0].mxu0
    %v618 = vpop.f32.mrb[0].mxu0
    %v619 = vadd.f32 %v415, %v618
    %v620 = vpop.f32.mrb[0].mxu0
    %621 = vmatprep.mubr.bf16.mxu0 0
    %622 = vmatmul.mubr.bf16.gmra.mrb[0].mxu0 %v579
    %v623 = vpop.f32.mrb[0].mxu0
    %v624 = vadd.f32 %v420, %v623
    %v625 = vpop.f32.mrb[0].mxu0
    %v626 = vpop.f32.mrb[0].mxu0
    %v627 = vadd.f32 %v423, %v626
    %v628 = vpop.f32.mrb[0].mxu0
    %629 = vdwg.mxu0
    %v634 = vcombine.high %v616, %v616
    %v636 = vunpack.c.l.s4 1983009808
    %v637 = vunpack.c.0.s8 %v636
    %v638 = vlaneseq
    %v639 = vshrl.u32 %v638, 7
    %v640 = vsub.s32 %v637, %v639
    %v641 = vrot.slane %v616, %v640
    %v643 = vunpack.c.l.s4 1983009808
    %v644 = vunpack.c.0.s8 %v643
    %v645 = vlaneseq
    %v646 = vshrl.u32 %v645, 7
    %v647 = vsub.s32 %v644, %v646
    %v648 = vrot.slane %v634, %v647
    %v649 = vcombine.high %v641, %v641
    %v650 = vcombine.high %v648, %v648
    %v651 = vcombine.high %v619, %v619
    %v653 = vunpack.c.l.s4 1983009808
    %v654 = vunpack.c.0.s8 %v653
    %v655 = vlaneseq
    %v656 = vshrl.u32 %v655, 7
    %v657 = vsub.s32 %v654, %v656
    %v658 = vrot.slane %v619, %v657
    %v660 = vunpack.c.l.s4 1983009808
    %v661 = vunpack.c.0.s8 %v660
    %v662 = vlaneseq
    %v663 = vshrl.u32 %v662, 7
    %v664 = vsub.s32 %v661, %v663
    %v665 = vrot.slane %v651, %v664
    %v666 = vcombine.high %v658, %v658
    %v667 = vcombine.high %v665, %v665
    %v668 = vcombine.high %v624, %v624
    %v670 = vunpack.c.l.s4 1983009808
    %v671 = vunpack.c.0.s8 %v670
    %v672 = vlaneseq
    %v673 = vshrl.u32 %v672, 7
    %v674 = vsub.s32 %v671, %v673
    %v675 = vrot.slane %v624, %v674
    %v677 = vunpack.c.l.s4 1983009808
    %v678 = vunpack.c.0.s8 %v677
    %v679 = vlaneseq
    %v680 = vshrl.u32 %v679, 7
    %v681 = vsub.s32 %v678, %v680
    %v682 = vrot.slane %v668, %v681
    %v683 = vcombine.high %v675, %v675
    %v684 = vcombine.high %v682, %v682
    %v686 = vunpack.c.l.s4 1983009808
    %v687 = vunpack.c.0.s8 %v686
    %v688 = vlaneseq
    %v689 = vshrl.u32 %v688, 7
    %v690 = vsub.s32 %v687, %v689
    %v691 = vrot.slane %v627, %v690
    %v692 = vcombine.high %v691, %v691
    %v707 = vld [vmem:[%s0] sm:$0xe]
    %v708 = vld [vmem:[%s0 + $0x4] sm:$0xf]
    %v709 = vld [vmem:[%s0 + $0xc] sm:$0xe]
    %v710 = vld [vmem:[%s0 + $0x10] sm:$0xf]
    %s711 = scalar_lea.vmem %s1, 32
    %v712 = vld [vmem:[%s711] sm:$0xf]
    %v713 = vld [vmem:[%s711 + $0x4] sm:$0xf]
    %v714 = vld [vmem:[%s711 + $0x8] sm:$0xf]
    %v715 = vld [vmem:[%s711 + $0xc] sm:$0xf]
    %v721 = vunpack.c.l.s4 1966171168
    %v722 = vunpack.c.0.s8 %v721
    %v723 = vlaneseq
    %v724 = vshrl.u32 %v723, 7
    %v725 = vsub.s32 %v722, %v724
    %v726 = vrot.slane %v707, %v725
    %v727 = vcombine.high %v726, %v726
    %v729 = vunpack.c.l.s4 1966171168
    %v730 = vunpack.c.0.s8 %v729
    %v731 = vlaneseq
    %v732 = vshrl.u32 %v731, 7
    %v733 = vsub.s32 %v730, %v732
    %v734 = vrot.slane %v726, %v733
    %v736 = vunpack.c.l.s4 1966171168
    %v737 = vunpack.c.0.s8 %v736
    %v738 = vlaneseq
    %v739 = vshrl.u32 %v738, 7
    %v740 = vsub.s32 %v737, %v739
    %v741 = vrot.slane %v727, %v740
    %v742 = vcombine.high %v734, %v734
    %v743 = vcombine.high %v741, %v741
    %v745 = vunpack.c.l.s4 1966171168
    %v746 = vunpack.c.0.s8 %v745
    %v747 = vlaneseq
    %v748 = vshrl.u32 %v747, 7
    %v749 = vsub.s32 %v746, %v748
    %v750 = vrot.slane %v708, %v749
    %v751 = vcombine.high %v750, %v750
    %v753 = vunpack.c.l.s4 1966171168
    %v754 = vunpack.c.0.s8 %v753
    %v755 = vlaneseq
    %v756 = vshrl.u32 %v755, 7
    %v757 = vsub.s32 %v754, %v756
    %v758 = vrot.slane %v750, %v757
    %v760 = vunpack.c.l.s4 1966171168
    %v761 = vunpack.c.0.s8 %v760
    %v762 = vlaneseq
    %v763 = vshrl.u32 %v762, 7
    %v764 = vsub.s32 %v761, %v763
    %v765 = vrot.slane %v751, %v764
    %v766 = vcombine.high %v758, %v758
    %v767 = vcombine.high %v765, %v765
    %v769 = vunpack.c.l.s4 1966171168
    %v770 = vunpack.c.0.s8 %v769
    %v771 = vlaneseq
    %v772 = vshrl.u32 %v771, 7
    %v773 = vsub.s32 %v770, %v772
    %v774 = vrot.slane %v709, %v773
    %v775 = vcombine.high %v774, %v774
    %v777 = vunpack.c.l.s4 1966171168
    %v778 = vunpack.c.0.s8 %v777
    %v779 = vlaneseq
    %v780 = vshrl.u32 %v779, 7
    %v781 = vsub.s32 %v778, %v780
    %v782 = vrot.slane %v774, %v781
    %v784 = vunpack.c.l.s4 1966171168
    %v785 = vunpack.c.0.s8 %v784
    %v786 = vlaneseq
    %v787 = vshrl.u32 %v786, 7
    %v788 = vsub.s32 %v785, %v787
    %v789 = vrot.slane %v775, %v788
    %v790 = vcombine.high %v782, %v782
    %v791 = vcombine.high %v789, %v789
    %v793 = vunpack.c.l.s4 1966171168
    %v794 = vunpack.c.0.s8 %v793
    %v795 = vlaneseq
    %v796 = vshrl.u32 %v795, 7
    %v797 = vsub.s32 %v794, %v796
    %v798 = vrot.slane %v710, %v797
    %v799 = vcombine.high %v798, %v798
    %v801 = vunpack.c.l.s4 1966171168
    %v802 = vunpack.c.0.s8 %v801
    %v803 = vlaneseq
    %v804 = vshrl.u32 %v803, 7
    %v805 = vsub.s32 %v802, %v804
    %v806 = vrot.slane %v798, %v805
    %v808 = vunpack.c.l.s4 1966171168
    %v809 = vunpack.c.0.s8 %v808
    %v810 = vlaneseq
    %v811 = vshrl.u32 %v810, 7
    %v812 = vsub.s32 %v809, %v811
    %v813 = vrot.slane %v799, %v812
    %v814 = vcombine.high %v806, %v806
    %v815 = vcombine.high %v813, %v813
    %v816 = vcombine.low %v741, %v742
    %v817 = vcombine.low %v743, %v758
    %v818 = vcombine.low %v765, %v766
    %v819 = vcombine.low %v767, %v789
    %v821 = vunpack.c.l.s4 1966171168
    %v822 = vunpack.c.0.s8 %v821
    %v823 = vlaneseq
    %v824 = vshrl.u32 %v823, 7
    %v825 = vsub.s32 %v822, %v824
    %v826 = vrot.slane %v816, %v825
    %v828 = vunpack.c.l.s4 1966171168
    %v829 = vunpack.c.0.s8 %v828
    %v830 = vlaneseq
    %v831 = vshrl.u32 %v830, 7
    %v832 = vsub.s32 %v829, %v831
    %v833 = vrot.slane %v817, %v832
    %v835 = vunpack.c.l.s4 1966171168
    %v836 = vunpack.c.0.s8 %v835
    %v837 = vlaneseq
    %v838 = vshrl.u32 %v837, 7
    %v839 = vsub.s32 %v836, %v838
    %v840 = vrot.slane %v818, %v839
    %v842 = vunpack.c.l.s4 1966171168
    %v843 = vunpack.c.0.s8 %v842
    %v844 = vlaneseq
    %v845 = vshrl.u32 %v844, 7
    %v846 = vsub.s32 %v843, %v845
    %v847 = vrot.slane %v819, %v846
    %v848 = vcombine.low %v826, %v833
    %v849 = vcombine.low %v840, %v847
    %v851 = vunpack.c.l.s4 1966171168
    %v852 = vunpack.c.0.s8 %v851
    %v853 = vlaneseq
    %v854 = vshrl.u32 %v853, 7
    %v855 = vsub.s32 %v852, %v854
    %v856 = vrot.slane %v848, %v855
    %v858 = vunpack.c.l.s4 1966171168
    %v859 = vunpack.c.0.s8 %v858
    %v860 = vlaneseq
    %v861 = vshrl.u32 %v860, 7
    %v862 = vsub.s32 %v859, %v861
    %v863 = vrot.slane %v849, %v862
    %v864 = vcombine.low %v856, %v863
    %v865 = vcombine.low %v790, %v791
    %v866 = vcombine.low %v806, %v813
    %v867 = vcombine.low %v814, %v815
    %v869 = vunpack.c.l.s4 1966171168
    %v870 = vunpack.c.0.s8 %v869
    %v871 = vlaneseq
    %v872 = vshrl.u32 %v871, 7
    %v873 = vsub.s32 %v870, %v872
    %v874 = vrot.slane %v865, %v873
    %v876 = vunpack.c.l.s4 1966171168
    %v877 = vunpack.c.0.s8 %v876
    %v878 = vlaneseq
    %v879 = vshrl.u32 %v878, 7
    %v880 = vsub.s32 %v877, %v879
    %v881 = vrot.slane %v866, %v880
    %v883 = vunpack.c.l.s4 1966171168
    %v884 = vunpack.c.0.s8 %v883
    %v885 = vlaneseq
    %v886 = vshrl.u32 %v885, 7
    %v887 = vsub.s32 %v884, %v886
    %v888 = vrot.slane %v867, %v887
    %v889 = vcombine.low %v874, %v881
    %v891 = vunpack.c.l.s4 1966171168
    %v892 = vunpack.c.0.s8 %v891
    %v893 = vlaneseq
    %v894 = vshrl.u32 %v893, 7
    %v895 = vsub.s32 %v892, %v894
    %v896 = vrot.slane %v889, %v895
    %v898 = vunpack.c.l.s4 1966171168
    %v899 = vunpack.c.0.s8 %v898
    %v900 = vlaneseq
    %v901 = vshrl.u32 %v900, 7
    %v902 = vsub.s32 %v899, %v901
    %v903 = vrot.slane %v888, %v902
    %v904 = vcombine.low %v896, %v903
    %v909 = vunpack.c.l.b16 %v712
    %v910 = vunpack.c.l.b16 %v713
    %v911 = vunpack.c.l.b16 %v714
    %v912 = vunpack.c.l.b16 %v715
    %v913 = vpack.c.b16 %v910, %v909
    %v914 = vpack.c.b16 %v912, %v911
    %v918 = vsel %vm370, %v864, 0
    %v921 = vsel %vm370, %v904, 0
    %923 = vmatprep.subr.bf16.mxu0 0
    %924 = vmatpush1.bf16.msra.mxu0 %v913
    %925 = vmatprep.subr.bf16.mxu0 0
    %926 = vmatpush1.bf16.msra.mxu0 %v914
    %927 = vmatprep.subr.bf16.mxu0 0
    %928 = vmatpush1.bf16.msra.mxu0 0
    %929 = vmatprep.subr.bf16.mxu0 0
    %930 = vmatpush1.bf16.msra.mxu0 0
    %931 = vmatprep.subr.bf16.mxu0 0
    %932 = vmatpush1.bf16.msra.mxu0 0
    %933 = vmatprep.subr.bf16.mxu0 0
    %934 = vmatpush1.bf16.msra.mxu0 0
    %935 = vmatprep.subr.bf16.mxu0 0
    %936 = vmatpush1.bf16.msra.mxu0 0
    %937 = vmatprep.subr.bf16.mxu0 0
    %938 = vmatpush1.bf16.msra.mxu0 0
    %939 = vmatprep.subr.bf16.mxu0 0
    %940 = vmatpush1.bf16.msra.mxu0 0
    %941 = vmatprep.subr.bf16.mxu0 0
    %942 = vmatpush1.bf16.msra.mxu0 0
    %943 = vmatprep.subr.bf16.mxu0 0
    %944 = vmatpush1.bf16.msra.mxu0 0
    %945 = vmatprep.subr.bf16.mxu0 0
    %946 = vmatpush1.bf16.msra.mxu0 0
    %947 = vmatprep.subr.bf16.mxu0 0
    %948 = vmatpush1.bf16.msra.mxu0 0
    %949 = vmatprep.subr.bf16.mxu0 0
    %950 = vmatpush1.bf16.msra.mxu0 0
    %951 = vmatprep.subr.bf16.mxu0 0
    %952 = vmatpush1.bf16.msra.mxu0 0
    %953 = vmatprep.subr.bf16.mxu0 0
    %954 = vmatpush1.bf16.msra.mxu0 0
    %955 = vmatprep.mubr.bf16.mxu0 0
    %956 = vmatmul.mubr.bf16.gmra.mrb[0].mxu0 %v918
    %v957 = vpop.f32.mrb[0].mxu0
    %v958 = vadd.f32 0.0, %v957
    %v959 = vpop.f32.mrb[0].mxu0
    %v960 = vpop.f32.mrb[0].mxu0
    %v961 = vadd.f32 0.0, %v960
    %v962 = vpop.f32.mrb[0].mxu0
    %963 = vmatprep.mubr.bf16.mxu0 0
    %964 = vmatmul.mubr.bf16.gmra.mrb[0].mxu0 %v921
    %v965 = vpop.f32.mrb[0].mxu0
    %v966 = vadd.f32 0.0, %v965
    %v967 = vpop.f32.mrb[0].mxu0
    %v968 = vpop.f32.mrb[0].mxu0
    %v969 = vadd.f32 0.0, %v968
    %v970 = vpop.f32.mrb[0].mxu0
    %971 = vdwg.mxu0
    %v976 = vcombine.high %v958, %v958
    %v978 = vunpack.c.l.s4 1983009808
    %v979 = vunpack.c.0.s8 %v978
    %v980 = vlaneseq
    %v981 = vshrl.u32 %v980, 7
    %v982 = vsub.s32 %v979, %v981
    %v983 = vrot.slane %v958, %v982
    %v985 = vunpack.c.l.s4 1983009808
    %v986 = vunpack.c.0.s8 %v985
    %v987 = vlaneseq
    %v988 = vshrl.u32 %v987, 7
    %v989 = vsub.s32 %v986, %v988
    %v990 = vrot.slane %v976, %v989
    %v991 = vcombine.high %v983, %v983
    %v992 = vcombine.high %v990, %v990
    %v993 = vcombine.high %v961, %v961
    %v995 = vunpack.c.l.s4 1983009808
    %v996 = vunpack.c.0.s8 %v995
    %v997 = vlaneseq
    %v998 = vshrl.u32 %v997, 7
    %v999 = vsub.s32 %v996, %v998
    %v1000 = vrot.slane %v961, %v999
    %v1002 = vunpack.c.l.s4 1983009808
    %v1003 = vunpack.c.0.s8 %v1002
    %v1004 = vlaneseq
    %v1005 = vshrl.u32 %v1004, 7
    %v1006 = vsub.s32 %v1003, %v1005
    %v1007 = vrot.slane %v993, %v1006
    %v1008 = vcombine.high %v1000, %v1000
    %v1009 = vcombine.high %v1007, %v1007
    %v1010 = vcombine.high %v966, %v966
    %v1012 = vunpack.c.l.s4 1983009808
    %v1013 = vunpack.c.0.s8 %v1012
    %v1014 = vlaneseq
    %v1015 = vshrl.u32 %v1014, 7
    %v1016 = vsub.s32 %v1013, %v1015
    %v1017 = vrot.slane %v966, %v1016
    %v1019 = vunpack.c.l.s4 1983009808
    %v1020 = vunpack.c.0.s8 %v1019
    %v1021 = vlaneseq
    %v1022 = vshrl.u32 %v1021, 7
    %v1023 = vsub.s32 %v1020, %v1022
    %v1024 = vrot.slane %v1010, %v1023
    %v1025 = vcombine.high %v1017, %v1017
    %v1026 = vcombine.high %v1024, %v1024
    %v1028 = vunpack.c.l.s4 1983009808
    %v1029 = vunpack.c.0.s8 %v1028
    %v1030 = vlaneseq
    %v1031 = vshrl.u32 %v1030, 7
    %v1032 = vsub.s32 %v1029, %v1031
    %v1033 = vrot.slane %v969, %v1032
    %v1034 = vcombine.high %v1033, %v1033
    %v1049 = vadd.f32 %v641, %v983
    %v1050 = vadd.f32 %v649, %v991
    %v1051 = vadd.f32 %v648, %v990
    %v1052 = vadd.f32 %v650, %v992
    %v1053 = vadd.f32 %v658, %v1000
    %v1054 = vadd.f32 %v666, %v1008
    %v1055 = vadd.f32 %v665, %v1007
    %v1056 = vadd.f32 %v667, %v1009
    %v1057 = vadd.f32 %v675, %v1017
    %v1058 = vadd.f32 %v683, %v1025
    %v1059 = vadd.f32 %v682, %v1024
    %v1060 = vadd.f32 %v684, %v1026
    %v1061 = vadd.f32 %v691, %v1033
    %v1062 = vadd.f32 %v692, %v1034
    %v1063 = vld [vmem:[%s0] sm:$0xe]
    %v1064 = vld [vmem:[%s0 + $0x4] sm:$0xf]
    %v1065 = vld [vmem:[%s0 + $0x8] sm:$0x1]
    %v1066 = vld [vmem:[%s0 + $0xc] sm:$0xe]
    %v1067 = vld [vmem:[%s0 + $0x10] sm:$0xf]
    %v1068 = vld [vmem:[%s0 + $0x14] sm:$0x1]
    %s1069 = scalar_lea.vmem %s1, 48
    %v1070 = vld [vmem:[%s1069] sm:$0xf]
    %v1071 = vld [vmem:[%s1069 + $0x4] sm:$0xf]
    %v1072 = vld [vmem:[%s1069 + $0x8] sm:$0xf]
    %v1073 = vld [vmem:[%s1069 + $0xc] sm:$0xf]
    %v1081 = vunpack.c.l.s4 1966171168
    %v1082 = vunpack.c.0.s8 %v1081
    %v1083 = vlaneseq
    %v1084 = vshrl.u32 %v1083, 7
    %v1085 = vsub.s32 %v1082, %v1084
    %v1086 = vrot.slane %v1063, %v1085
    %v1087 = vcombine.high %v1086, %v1086
    %v1089 = vunpack.c.l.s4 1966171168
    %v1090 = vunpack.c.0.s8 %v1089
    %v1091 = vlaneseq
    %v1092 = vshrl.u32 %v1091, 7
    %v1093 = vsub.s32 %v1090, %v1092
    %v1094 = vrot.slane %v1086, %v1093
    %v1096 = vunpack.c.l.s4 1966171168
    %v1097 = vunpack.c.0.s8 %v1096
    %v1098 = vlaneseq
    %v1099 = vshrl.u32 %v1098, 7
    %v1100 = vsub.s32 %v1097, %v1099
    %v1101 = vrot.slane %v1087, %v1100
    %v1102 = vcombine.high %v1094, %v1094
    %v1103 = vcombine.high %v1101, %v1101
    %v1105 = vunpack.c.l.s4 1966171168
    %v1106 = vunpack.c.0.s8 %v1105
    %v1107 = vlaneseq
    %v1108 = vshrl.u32 %v1107, 7
    %v1109 = vsub.s32 %v1106, %v1108
    %v1110 = vrot.slane %v1064, %v1109
    %v1111 = vcombine.high %v1110, %v1110
    %v1113 = vunpack.c.l.s4 1966171168
    %v1114 = vunpack.c.0.s8 %v1113
    %v1115 = vlaneseq
    %v1116 = vshrl.u32 %v1115, 7
    %v1117 = vsub.s32 %v1114, %v1116
    %v1118 = vrot.slane %v1110, %v1117
    %v1120 = vunpack.c.l.s4 1966171168
    %v1121 = vunpack.c.0.s8 %v1120
    %v1122 = vlaneseq
    %v1123 = vshrl.u32 %v1122, 7
    %v1124 = vsub.s32 %v1121, %v1123
    %v1125 = vrot.slane %v1111, %v1124
    %v1126 = vcombine.high %v1118, %v1118
    %v1127 = vcombine.high %v1125, %v1125
    %v1129 = vunpack.c.l.s4 1966171168
    %v1130 = vunpack.c.0.s8 %v1129
    %v1131 = vlaneseq
    %v1132 = vshrl.u32 %v1131, 7
    %v1133 = vsub.s32 %v1130, %v1132
    %v1134 = vrot.slane %v1065, %v1133
    %v1136 = vunpack.c.l.s4 1966171168
    %v1137 = vunpack.c.0.s8 %v1136
    %v1138 = vlaneseq
    %v1139 = vshrl.u32 %v1138, 7
    %v1140 = vsub.s32 %v1137, %v1139
    %v1141 = vrot.slane %v1134, %v1140
    %v1143 = vunpack.c.l.s4 1966171168
    %v1144 = vunpack.c.0.s8 %v1143
    %v1145 = vlaneseq
    %v1146 = vshrl.u32 %v1145, 7
    %v1147 = vsub.s32 %v1144, %v1146
    %v1148 = vrot.slane %v1066, %v1147
    %v1149 = vcombine.high %v1148, %v1148
    %v1151 = vunpack.c.l.s4 1966171168
    %v1152 = vunpack.c.0.s8 %v1151
    %v1153 = vlaneseq
    %v1154 = vshrl.u32 %v1153, 7
    %v1155 = vsub.s32 %v1152, %v1154
    %v1156 = vrot.slane %v1148, %v1155
    %v1158 = vunpack.c.l.s4 1966171168
    %v1159 = vunpack.c.0.s8 %v1158
    %v1160 = vlaneseq
    %v1161 = vshrl.u32 %v1160, 7
    %v1162 = vsub.s32 %v1159, %v1161
    %v1163 = vrot.slane %v1149, %v1162
    %v1164 = vcombine.high %v1156, %v1156
    %v1165 = vcombine.high %v1163, %v1163
    %v1167 = vunpack.c.l.s4 1966171168
    %v1168 = vunpack.c.0.s8 %v1167
    %v1169 = vlaneseq
    %v1170 = vshrl.u32 %v1169, 7
    %v1171 = vsub.s32 %v1168, %v1170
    %v1172 = vrot.slane %v1067, %v1171
    %v1173 = vcombine.high %v1172, %v1172
    %v1175 = vunpack.c.l.s4 1966171168
    %v1176 = vunpack.c.0.s8 %v1175
    %v1177 = vlaneseq
    %v1178 = vshrl.u32 %v1177, 7
    %v1179 = vsub.s32 %v1176, %v1178
    %v1180 = vrot.slane %v1172, %v1179
    %v1182 = vunpack.c.l.s4 1966171168
    %v1183 = vunpack.c.0.s8 %v1182
    %v1184 = vlaneseq
    %v1185 = vshrl.u32 %v1184, 7
    %v1186 = vsub.s32 %v1183, %v1185
    %v1187 = vrot.slane %v1173, %v1186
    %v1188 = vcombine.high %v1180, %v1180
    %v1189 = vcombine.high %v1187, %v1187
    %v1191 = vunpack.c.l.s4 1966171168
    %v1192 = vunpack.c.0.s8 %v1191
    %v1193 = vlaneseq
    %v1194 = vshrl.u32 %v1193, 7
    %v1195 = vsub.s32 %v1192, %v1194
    %v1196 = vrot.slane %v1068, %v1195
    %v1198 = vunpack.c.l.s4 1966171168
    %v1199 = vunpack.c.0.s8 %v1198
    %v1200 = vlaneseq
    %v1201 = vshrl.u32 %v1200, 7
    %v1202 = vsub.s32 %v1199, %v1201
    %v1203 = vrot.slane %v1196, %v1202
    %v1205 = vshrl.u32 %v1101, 16
    %v1207 = vrot.slane %v1205, 7
    %v1208 = vrot.slane %v1207, 1
    %v1210 = vshll.u32 %v1102, 16
    %v1212 = vsel %vm154, %v1208, %v1210
    %v1213 = vshrl.u32 %v1102, 16
    %v1215 = vrot.slane %v1213, 7
    %v1216 = vrot.slane %v1215, 1
    %v1218 = vshll.u32 %v1103, 16
    %v1220 = vsel %vm154, %v1216, %v1218
    %v1221 = vshrl.u32 %v1103, 16
    %v1223 = vrot.slane %v1221, 7
    %v1224 = vrot.slane %v1223, 1
    %v1226 = vshll.u32 %v1118, 16
    %v1228 = vsel %vm154, %v1224, %v1226
    %v1229 = vshrl.u32 %v1118, 16
    %v1231 = vrot.slane %v1229, 7
    %v1232 = vrot.slane %v1231, 1
    %v1234 = vshll.u32 %v1125, 16
    %v1236 = vsel %vm154, %v1232, %v1234
    %v1237 = vshrl.u32 %v1125, 16
    %v1239 = vrot.slane %v1237, 7
    %v1240 = vrot.slane %v1239, 1
    %v1242 = vshll.u32 %v1126, 16
    %v1244 = vsel %vm154, %v1240, %v1242
    %v1245 = vshrl.u32 %v1126, 16
    %v1247 = vrot.slane %v1245, 7
    %v1248 = vrot.slane %v1247, 1
    %v1250 = vshll.u32 %v1127, 16
    %v1252 = vsel %vm154, %v1248, %v1250
    %v1253 = vshrl.u32 %v1127, 16
    %v1255 = vrot.slane %v1253, 7
    %v1256 = vrot.slane %v1255, 1
    %v1258 = vshll.u32 %v1141, 16
    %v1260 = vsel %vm154, %v1256, %v1258
    %v1262 = vshrl.u32 %v1163, 16
    %v1264 = vrot.slane %v1262, 7
    %v1265 = vrot.slane %v1264, 1
    %v1267 = vshll.u32 %v1164, 16
    %v1269 = vsel %vm154, %v1265, %v1267
    %v1270 = vshrl.u32 %v1164, 16
    %v1272 = vrot.slane %v1270, 7
    %v1273 = vrot.slane %v1272, 1
    %v1275 = vshll.u32 %v1165, 16
    %v1277 = vsel %vm154, %v1273, %v1275
    %v1278 = vshrl.u32 %v1165, 16
    %v1280 = vrot.slane %v1278, 7
    %v1281 = vrot.slane %v1280, 1
    %v1283 = vshll.u32 %v1180, 16
    %v1285 = vsel %vm154, %v1281, %v1283
    %v1286 = vshrl.u32 %v1180, 16
    %v1288 = vrot.slane %v1286, 7
    %v1289 = vrot.slane %v1288, 1
    %v1291 = vshll.u32 %v1187, 16
    %v1293 = vsel %vm154, %v1289, %v1291
    %v1294 = vshrl.u32 %v1187, 16
    %v1296 = vrot.slane %v1294, 7
    %v1297 = vrot.slane %v1296, 1
    %v1299 = vshll.u32 %v1188, 16
    %v1301 = vsel %vm154, %v1297, %v1299
    %v1302 = vshrl.u32 %v1188, 16
    %v1304 = vrot.slane %v1302, 7
    %v1305 = vrot.slane %v1304, 1
    %v1307 = vshll.u32 %v1189, 16
    %v1309 = vsel %vm154, %v1305, %v1307
    %v1310 = vshrl.u32 %v1189, 16
    %v1312 = vrot.slane %v1310, 7
    %v1313 = vrot.slane %v1312, 1
    %v1315 = vshll.u32 %v1203, 16
    %v1317 = vsel %vm154, %v1313, %v1315
    %v1318 = vcombine.low %v1212, %v1220
    %v1319 = vcombine.low %v1228, %v1236
    %v1320 = vcombine.low %v1244, %v1252
    %v1321 = vcombine.low %v1260, %v1269
    %v1323 = vunpack.c.l.s4 1966171168
    %v1324 = vunpack.c.0.s8 %v1323
    %v1325 = vlaneseq
    %v1326 = vshrl.u32 %v1325, 7
    %v1327 = vsub.s32 %v1324, %v1326
    %v1328 = vrot.slane %v1318, %v1327
    %v1330 = vunpack.c.l.s4 1966171168
    %v1331 = vunpack.c.0.s8 %v1330
    %v1332 = vlaneseq
    %v1333 = vshrl.u32 %v1332, 7
    %v1334 = vsub.s32 %v1331, %v1333
    %v1335 = vrot.slane %v1319, %v1334
    %v1337 = vunpack.c.l.s4 1966171168
    %v1338 = vunpack.c.0.s8 %v1337
    %v1339 = vlaneseq
    %v1340 = vshrl.u32 %v1339, 7
    %v1341 = vsub.s32 %v1338, %v1340
    %v1342 = vrot.slane %v1320, %v1341
    %v1344 = vunpack.c.l.s4 1966171168
    %v1345 = vunpack.c.0.s8 %v1344
    %v1346 = vlaneseq
    %v1347 = vshrl.u32 %v1346, 7
    %v1348 = vsub.s32 %v1345, %v1347
    %v1349 = vrot.slane %v1321, %v1348
    %v1350 = vcombine.low %v1328, %v1335
    %v1351 = vcombine.low %v1342, %v1349
    %v1353 = vunpack.c.l.s4 1966171168
    %v1354 = vunpack.c.0.s8 %v1353
    %v1355 = vlaneseq
    %v1356 = vshrl.u32 %v1355, 7
    %v1357 = vsub.s32 %v1354, %v1356
    %v1358 = vrot.slane %v1350, %v1357
    %v1360 = vunpack.c.l.s4 1966171168
    %v1361 = vunpack.c.0.s8 %v1360
    %v1362 = vlaneseq
    %v1363 = vshrl.u32 %v1362, 7
    %v1364 = vsub.s32 %v1361, %v1363
    %v1365 = vrot.slane %v1351, %v1364
    %v1366 = vcombine.low %v1358, %v1365
    %v1367 = vcombine.low %v1277, %v1285
    %v1368 = vcombine.low %v1293, %v1301
    %v1369 = vcombine.low %v1309, %v1317
    %v1371 = vunpack.c.l.s4 1966171168
    %v1372 = vunpack.c.0.s8 %v1371
    %v1373 = vlaneseq
    %v1374 = vshrl.u32 %v1373, 7
    %v1375 = vsub.s32 %v1372, %v1374
    %v1376 = vrot.slane %v1367, %v1375
    %v1378 = vunpack.c.l.s4 1966171168
    %v1379 = vunpack.c.0.s8 %v1378
    %v1380 = vlaneseq
    %v1381 = vshrl.u32 %v1380, 7
    %v1382 = vsub.s32 %v1379, %v1381
    %v1383 = vrot.slane %v1368, %v1382
    %v1385 = vunpack.c.l.s4 1966171168
    %v1386 = vunpack.c.0.s8 %v1385
    %v1387 = vlaneseq
    %v1388 = vshrl.u32 %v1387, 7
    %v1389 = vsub.s32 %v1386, %v1388
    %v1390 = vrot.slane %v1369, %v1389
    %v1391 = vcombine.low %v1376, %v1383
    %v1393 = vunpack.c.l.s4 1966171168
    %v1394 = vunpack.c.0.s8 %v1393
    %v1395 = vlaneseq
    %v1396 = vshrl.u32 %v1395, 7
    %v1397 = vsub.s32 %v1394, %v1396
    %v1398 = vrot.slane %v1391, %v1397
    %v1400 = vunpack.c.l.s4 1966171168
    %v1401 = vunpack.c.0.s8 %v1400
    %v1402 = vlaneseq
    %v1403 = vshrl.u32 %v1402, 7
    %v1404 = vsub.s32 %v1401, %v1403
    %v1405 = vrot.slane %v1390, %v1404
    %v1406 = vcombine.low %v1398, %v1405
    %v1411 = vunpack.c.l.b16 %v1070
    %v1412 = vunpack.c.l.b16 %v1071
    %v1413 = vunpack.c.l.b16 %v1072
    %v1414 = vunpack.c.l.b16 %v1073
    %v1415 = vpack.c.b16 %v1412, %v1411
    %v1416 = vpack.c.b16 %v1414, %v1413
    %v1420 = vsel %vm370, %v1366, 0
    %v1423 = vsel %vm370, %v1406, 0
    %1425 = vmatprep.subr.bf16.mxu0 0
    %1426 = vmatpush1.bf16.msra.mxu0 %v1415
    %1427 = vmatprep.subr.bf16.mxu0 0
    %1428 = vmatpush1.bf16.msra.mxu0 %v1416
    %1429 = vmatprep.subr.bf16.mxu0 0
    %1430 = vmatpush1.bf16.msra.mxu0 0
    %1431 = vmatprep.subr.bf16.mxu0 0
    %1432 = vmatpush1.bf16.msra.mxu0 0
    %1433 = vmatprep.subr.bf16.mxu0 0
    %1434 = vmatpush1.bf16.msra.mxu0 0
    %1435 = vmatprep.subr.bf16.mxu0 0
    %1436 = vmatpush1.bf16.msra.mxu0 0
    %1437 = vmatprep.subr.bf16.mxu0 0
    %1438 = vmatpush1.bf16.msra.mxu0 0
    %1439 = vmatprep.subr.bf16.mxu0 0
    %1440 = vmatpush1.bf16.msra.mxu0 0
    %1441 = vmatprep.subr.bf16.mxu0 0
    %1442 = vmatpush1.bf16.msra.mxu0 0
    %1443 = vmatprep.subr.bf16.mxu0 0
    %1444 = vmatpush1.bf16.msra.mxu0 0
    %1445 = vmatprep.subr.bf16.mxu0 0
    %1446 = vmatpush1.bf16.msra.mxu0 0
    %1447 = vmatprep.subr.bf16.mxu0 0
    %1448 = vmatpush1.bf16.msra.mxu0 0
    %1449 = vmatprep.subr.bf16.mxu0 0
    %1450 = vmatpush1.bf16.msra.mxu0 0
    %1451 = vmatprep.subr.bf16.mxu0 0
    %1452 = vmatpush1.bf16.msra.mxu0 0
    %1453 = vmatprep.subr.bf16.mxu0 0
    %1454 = vmatpush1.bf16.msra.mxu0 0
    %1455 = vmatprep.subr.bf16.mxu0 0
    %1456 = vmatpush1.bf16.msra.mxu0 0
    %1457 = vmatprep.mubr.bf16.mxu0 0
    %1458 = vmatmul.mubr.bf16.gmra.mrb[0].mxu0 %v1420
    %v1459 = vpop.f32.mrb[0].mxu0
    %v1460 = vadd.f32 0.0, %v1459
    %v1461 = vpop.f32.mrb[0].mxu0
    %v1462 = vpop.f32.mrb[0].mxu0
    %v1463 = vadd.f32 0.0, %v1462
    %v1464 = vpop.f32.mrb[0].mxu0
    %1465 = vmatprep.mubr.bf16.mxu0 0
    %1466 = vmatmul.mubr.bf16.gmra.mrb[0].mxu0 %v1423
    %v1467 = vpop.f32.mrb[0].mxu0
    %v1468 = vadd.f32 0.0, %v1467
    %v1469 = vpop.f32.mrb[0].mxu0
    %v1470 = vpop.f32.mrb[0].mxu0
    %v1471 = vadd.f32 0.0, %v1470
    %v1472 = vpop.f32.mrb[0].mxu0
    %1473 = vdwg.mxu0
    %v1478 = vcombine.high %v1460, %v1460
    %v1480 = vunpack.c.l.s4 1983009808
    %v1481 = vunpack.c.0.s8 %v1480
    %v1482 = vlaneseq
    %v1483 = vshrl.u32 %v1482, 7
    %v1484 = vsub.s32 %v1481, %v1483
    %v1485 = vrot.slane %v1460, %v1484
    %v1487 = vunpack.c.l.s4 1983009808
    %v1488 = vunpack.c.0.s8 %v1487
    %v1489 = vlaneseq
    %v1490 = vshrl.u32 %v1489, 7
    %v1491 = vsub.s32 %v1488, %v1490
    %v1492 = vrot.slane %v1478, %v1491
    %v1493 = vcombine.high %v1485, %v1485
    %v1494 = vcombine.high %v1492, %v1492
    %v1495 = vcombine.high %v1463, %v1463
    %v1497 = vunpack.c.l.s4 1983009808
    %v1498 = vunpack.c.0.s8 %v1497
    %v1499 = vlaneseq
    %v1500 = vshrl.u32 %v1499, 7
    %v1501 = vsub.s32 %v1498, %v1500
    %v1502 = vrot.slane %v1463, %v1501
    %v1504 = vunpack.c.l.s4 1983009808
    %v1505 = vunpack.c.0.s8 %v1504
    %v1506 = vlaneseq
    %v1507 = vshrl.u32 %v1506, 7
    %v1508 = vsub.s32 %v1505, %v1507
    %v1509 = vrot.slane %v1495, %v1508
    %v1510 = vcombine.high %v1502, %v1502
    %v1511 = vcombine.high %v1509, %v1509
    %v1512 = vcombine.high %v1468, %v1468
    %v1514 = vunpack.c.l.s4 1983009808
    %v1515 = vunpack.c.0.s8 %v1514
    %v1516 = vlaneseq
    %v1517 = vshrl.u32 %v1516, 7
    %v1518 = vsub.s32 %v1515, %v1517
    %v1519 = vrot.slane %v1468, %v1518
    %v1521 = vunpack.c.l.s4 1983009808
    %v1522 = vunpack.c.0.s8 %v1521
    %v1523 = vlaneseq
    %v1524 = vshrl.u32 %v1523, 7
    %v1525 = vsub.s32 %v1522, %v1524
    %v1526 = vrot.slane %v1512, %v1525
    %v1527 = vcombine.high %v1519, %v1519
    %v1528 = vcombine.high %v1526, %v1526
    %v1530 = vunpack.c.l.s4 1983009808
    %v1531 = vunpack.c.0.s8 %v1530
    %v1532 = vlaneseq
    %v1533 = vshrl.u32 %v1532, 7
    %v1534 = vsub.s32 %v1531, %v1533
    %v1535 = vrot.slane %v1471, %v1534
    %v1536 = vcombine.high %v1535, %v1535
    %v1551 = vadd.f32 %v1049, %v1485
    %v1552 = vadd.f32 %v1050, %v1493
    %v1553 = vadd.f32 %v1051, %v1492
    %v1554 = vadd.f32 %v1052, %v1494
    %v1555 = vadd.f32 %v1053, %v1502
    %v1556 = vadd.f32 %v1054, %v1510
    %v1557 = vadd.f32 %v1055, %v1509
    %v1558 = vadd.f32 %v1056, %v1511
    %v1559 = vadd.f32 %v1057, %v1519
    %v1560 = vadd.f32 %v1058, %v1527
    %v1561 = vadd.f32 %v1059, %v1526
    %v1562 = vadd.f32 %v1060, %v1528
    %v1563 = vadd.f32 %v1061, %v1535
    %v1564 = vadd.f32 %v1062, %v1536
    %v1565 = vld [vmem:[%s0] sm:$0xc]
    %v1566 = vld [vmem:[%s0 + $0x4] sm:$0xf]
    %v1567 = vld [vmem:[%s0 + $0x8] sm:$0x1]
    %v1568 = vld [vmem:[%s0 + $0xc] sm:$0xc]
    %v1569 = vld [vmem:[%s0 + $0x10] sm:$0xf]
    %v1570 = vld [vmem:[%s0 + $0x14] sm:$0x1]
    %s1571 = scalar_lea.vmem %s1, 64
    %v1572 = vld [vmem:[%s1571] sm:$0xf]
    %v1573 = vld [vmem:[%s1571 + $0x4] sm:$0xf]
    %v1574 = vld [vmem:[%s1571 + $0x8] sm:$0xf]
    %v1575 = vld [vmem:[%s1571 + $0xc] sm:$0xf]
    %v1583 = vunpack.c.l.s4 1966171168
    %v1584 = vunpack.c.0.s8 %v1583
    %v1585 = vlaneseq
    %v1586 = vshrl.u32 %v1585, 7
    %v1587 = vsub.s32 %v1584, %v1586
    %v1588 = vrot.slane %v1565, %v1587
    %v1589 = vcombine.high %v1588, %v1588
    %v1591 = vunpack.c.l.s4 1966171168
    %v1592 = vunpack.c.0.s8 %v1591
    %v1593 = vlaneseq
    %v1594 = vshrl.u32 %v1593, 7
    %v1595 = vsub.s32 %v1592, %v1594
    %v1596 = vrot.slane %v1588, %v1595
    %v1598 = vunpack.c.l.s4 1966171168
    %v1599 = vunpack.c.0.s8 %v1598
    %v1600 = vlaneseq
    %v1601 = vshrl.u32 %v1600, 7
    %v1602 = vsub.s32 %v1599, %v1601
    %v1603 = vrot.slane %v1589, %v1602
    %v1604 = vcombine.high %v1596, %v1596
    %v1605 = vcombine.high %v1603, %v1603
    %v1607 = vunpack.c.l.s4 1966171168
    %v1608 = vunpack.c.0.s8 %v1607
    %v1609 = vlaneseq
    %v1610 = vshrl.u32 %v1609, 7
    %v1611 = vsub.s32 %v1608, %v1610
    %v1612 = vrot.slane %v1566, %v1611
    %v1613 = vcombine.high %v1612, %v1612
    %v1615 = vunpack.c.l.s4 1966171168
    %v1616 = vunpack.c.0.s8 %v1615
    %v1617 = vlaneseq
    %v1618 = vshrl.u32 %v1617, 7
    %v1619 = vsub.s32 %v1616, %v1618
    %v1620 = vrot.slane %v1612, %v1619
    %v1622 = vunpack.c.l.s4 1966171168
    %v1623 = vunpack.c.0.s8 %v1622
    %v1624 = vlaneseq
    %v1625 = vshrl.u32 %v1624, 7
    %v1626 = vsub.s32 %v1623, %v1625
    %v1627 = vrot.slane %v1613, %v1626
    %v1628 = vcombine.high %v1620, %v1620
    %v1629 = vcombine.high %v1627, %v1627
    %v1631 = vunpack.c.l.s4 1966171168
    %v1632 = vunpack.c.0.s8 %v1631
    %v1633 = vlaneseq
    %v1634 = vshrl.u32 %v1633, 7
    %v1635 = vsub.s32 %v1632, %v1634
    %v1636 = vrot.slane %v1567, %v1635
    %v1638 = vunpack.c.l.s4 1966171168
    %v1639 = vunpack.c.0.s8 %v1638
    %v1640 = vlaneseq
    %v1641 = vshrl.u32 %v1640, 7
    %v1642 = vsub.s32 %v1639, %v1641
    %v1643 = vrot.slane %v1636, %v1642
    %v1645 = vunpack.c.l.s4 1966171168
    %v1646 = vunpack.c.0.s8 %v1645
    %v1647 = vlaneseq
    %v1648 = vshrl.u32 %v1647, 7
    %v1649 = vsub.s32 %v1646, %v1648
    %v1650 = vrot.slane %v1568, %v1649
    %v1651 = vcombine.high %v1650, %v1650
    %v1653 = vunpack.c.l.s4 1966171168
    %v1654 = vunpack.c.0.s8 %v1653
    %v1655 = vlaneseq
    %v1656 = vshrl.u32 %v1655, 7
    %v1657 = vsub.s32 %v1654, %v1656
    %v1658 = vrot.slane %v1650, %v1657
    %v1660 = vunpack.c.l.s4 1966171168
    %v1661 = vunpack.c.0.s8 %v1660
    %v1662 = vlaneseq
    %v1663 = vshrl.u32 %v1662, 7
    %v1664 = vsub.s32 %v1661, %v1663
    %v1665 = vrot.slane %v1651, %v1664
    %v1666 = vcombine.high %v1658, %v1658
    %v1667 = vcombine.high %v1665, %v1665
    %v1669 = vunpack.c.l.s4 1966171168
    %v1670 = vunpack.c.0.s8 %v1669
    %v1671 = vlaneseq
    %v1672 = vshrl.u32 %v1671, 7
    %v1673 = vsub.s32 %v1670, %v1672
    %v1674 = vrot.slane %v1569, %v1673
    %v1675 = vcombine.high %v1674, %v1674
    %v1677 = vunpack.c.l.s4 1966171168
    %v1678 = vunpack.c.0.s8 %v1677
    %v1679 = vlaneseq
    %v1680 = vshrl.u32 %v1679, 7
    %v1681 = vsub.s32 %v1678, %v1680
    %v1682 = vrot.slane %v1674, %v1681
    %v1684 = vunpack.c.l.s4 1966171168
    %v1685 = vunpack.c.0.s8 %v1684
    %v1686 = vlaneseq
    %v1687 = vshrl.u32 %v1686, 7
    %v1688 = vsub.s32 %v1685, %v1687
    %v1689 = vrot.slane %v1675, %v1688
    %v1690 = vcombine.high %v1682, %v1682
    %v1691 = vcombine.high %v1689, %v1689
    %v1693 = vunpack.c.l.s4 1966171168
    %v1694 = vunpack.c.0.s8 %v1693
    %v1695 = vlaneseq
    %v1696 = vshrl.u32 %v1695, 7
    %v1697 = vsub.s32 %v1694, %v1696
    %v1698 = vrot.slane %v1570, %v1697
    %v1700 = vunpack.c.l.s4 1966171168
    %v1701 = vunpack.c.0.s8 %v1700
    %v1702 = vlaneseq
    %v1703 = vshrl.u32 %v1702, 7
    %v1704 = vsub.s32 %v1701, %v1703
    %v1705 = vrot.slane %v1698, %v1704
    %v1706 = vcombine.low %v1604, %v1605
    %v1707 = vcombine.low %v1620, %v1627
    %v1708 = vcombine.low %v1628, %v1629
    %v1709 = vcombine.low %v1643, %v1666
    %v1711 = vunpack.c.l.s4 1966171168
    %v1712 = vunpack.c.0.s8 %v1711
    %v1713 = vlaneseq
    %v1714 = vshrl.u32 %v1713, 7
    %v1715 = vsub.s32 %v1712, %v1714
    %v1716 = vrot.slane %v1706, %v1715
    %v1718 = vunpack.c.l.s4 1966171168
    %v1719 = vunpack.c.0.s8 %v1718
    %v1720 = vlaneseq
    %v1721 = vshrl.u32 %v1720, 7
    %v1722 = vsub.s32 %v1719, %v1721
    %v1723 = vrot.slane %v1707, %v1722
    %v1725 = vunpack.c.l.s4 1966171168
    %v1726 = vunpack.c.0.s8 %v1725
    %v1727 = vlaneseq
    %v1728 = vshrl.u32 %v1727, 7
    %v1729 = vsub.s32 %v1726, %v1728
    %v1730 = vrot.slane %v1708, %v1729
    %v1732 = vunpack.c.l.s4 1966171168
    %v1733 = vunpack.c.0.s8 %v1732
    %v1734 = vlaneseq
    %v1735 = vshrl.u32 %v1734, 7
    %v1736 = vsub.s32 %v1733, %v1735
    %v1737 = vrot.slane %v1709, %v1736
    %v1738 = vcombine.low %v1716, %v1723
    %v1739 = vcombine.low %v1730, %v1737
    %v1741 = vunpack.c.l.s4 1966171168
    %v1742 = vunpack.c.0.s8 %v1741
    %v1743 = vlaneseq
    %v1744 = vshrl.u32 %v1743, 7
    %v1745 = vsub.s32 %v1742, %v1744
    %v1746 = vrot.slane %v1738, %v1745
    %v1748 = vunpack.c.l.s4 1966171168
    %v1749 = vunpack.c.0.s8 %v1748
    %v1750 = vlaneseq
    %v1751 = vshrl.u32 %v1750, 7
    %v1752 = vsub.s32 %v1749, %v1751
    %v1753 = vrot.slane %v1739, %v1752
    %v1754 = vcombine.low %v1746, %v1753
    %v1755 = vcombine.low %v1667, %v1682
    %v1756 = vcombine.low %v1689, %v1690
    %v1757 = vcombine.low %v1691, %v1705
    %v1759 = vunpack.c.l.s4 1966171168
    %v1760 = vunpack.c.0.s8 %v1759
    %v1761 = vlaneseq
    %v1762 = vshrl.u32 %v1761, 7
    %v1763 = vsub.s32 %v1760, %v1762
    %v1764 = vrot.slane %v1755, %v1763
    %v1766 = vunpack.c.l.s4 1966171168
    %v1767 = vunpack.c.0.s8 %v1766
    %v1768 = vlaneseq
    %v1769 = vshrl.u32 %v1768, 7
    %v1770 = vsub.s32 %v1767, %v1769
    %v1771 = vrot.slane %v1756, %v1770
    %v1773 = vunpack.c.l.s4 1966171168
    %v1774 = vunpack.c.0.s8 %v1773
    %v1775 = vlaneseq
    %v1776 = vshrl.u32 %v1775, 7
    %v1777 = vsub.s32 %v1774, %v1776
    %v1778 = vrot.slane %v1757, %v1777
    %v1779 = vcombine.low %v1764, %v1771
    %v1781 = vunpack.c.l.s4 1966171168
    %v1782 = vunpack.c.0.s8 %v1781
    %v1783 = vlaneseq
    %v1784 = vshrl.u32 %v1783, 7
    %v1785 = vsub.s32 %v1782, %v1784
    %v1786 = vrot.slane %v1779, %v1785
    %v1788 = vunpack.c.l.s4 1966171168
    %v1789 = vunpack.c.0.s8 %v1788
    %v1790 = vlaneseq
    %v1791 = vshrl.u32 %v1790, 7
    %v1792 = vsub.s32 %v1789, %v1791
    %v1793 = vrot.slane %v1778, %v1792
    %v1794 = vcombine.low %v1786, %v1793
    %v1799 = vunpack.c.l.b16 %v1572
    %v1800 = vunpack.c.l.b16 %v1573
    %v1801 = vunpack.c.l.b16 %v1574
    %v1802 = vunpack.c.l.b16 %v1575
    %v1803 = vpack.c.b16 %v1800, %v1799
    %v1804 = vpack.c.b16 %v1802, %v1801
    %v1808 = vsel %vm370, %v1754, 0
    %v1811 = vsel %vm370, %v1794, 0
    %1813 = vmatprep.subr.bf16.mxu0 0
    %1814 = vmatpush1.bf16.msra.mxu0 %v1803
    %1815 = vmatprep.subr.bf16.mxu0 0
    %1816 = vmatpush1.bf16.msra.mxu0 %v1804
    %1817 = vmatprep.subr.bf16.mxu0 0
    %1818 = vmatpush1.bf16.msra.mxu0 0
    %1819 = vmatprep.subr.bf16.mxu0 0
    %1820 = vmatpush1.bf16.msra.mxu0 0
    %1821 = vmatprep.subr.bf16.mxu0 0
    %1822 = vmatpush1.bf16.msra.mxu0 0
    %1823 = vmatprep.subr.bf16.mxu0 0
    %1824 = vmatpush1.bf16.msra.mxu0 0
    %1825 = vmatprep.subr.bf16.mxu0 0
    %1826 = vmatpush1.bf16.msra.mxu0 0
    %1827 = vmatprep.subr.bf16.mxu0 0
    %1828 = vmatpush1.bf16.msra.mxu0 0
    %1829 = vmatprep.subr.bf16.mxu0 0
    %1830 = vmatpush1.bf16.msra.mxu0 0
    %1831 = vmatprep.subr.bf16.mxu0 0
    %1832 = vmatpush1.bf16.msra.mxu0 0
    %1833 = vmatprep.subr.bf16.mxu0 0
    %1834 = vmatpush1.bf16.msra.mxu0 0
    %1835 = vmatprep.subr.bf16.mxu0 0
    %1836 = vmatpush1.bf16.msra.mxu0 0
    %1837 = vmatprep.subr.bf16.mxu0 0
    %1838 = vmatpush1.bf16.msra.mxu0 0
    %1839 = vmatprep.subr.bf16.mxu0 0
    %1840 = vmatpush1.bf16.msra.mxu0 0
    %1841 = vmatprep.subr.bf16.mxu0 0
    %1842 = vmatpush1.bf16.msra.mxu0 0
    %1843 = vmatprep.subr.bf16.mxu0 0
    %1844 = vmatpush1.bf16.msra.mxu0 0
    %1845 = vmatprep.mubr.bf16.mxu0 0
    %1846 = vmatmul.mubr.bf16.gmra.mrb[0].mxu0 %v1808
    %v1847 = vpop.f32.mrb[0].mxu0
    %v1848 = vadd.f32 0.0, %v1847
    %v1849 = vpop.f32.mrb[0].mxu0
    %v1850 = vpop.f32.mrb[0].mxu0
    %v1851 = vadd.f32 0.0, %v1850
    %v1852 = vpop.f32.mrb[0].mxu0
    %1853 = vmatprep.mubr.bf16.mxu0 0
    %1854 = vmatmul.mubr.bf16.gmra.mrb[0].mxu0 %v1811
    %v1855 = vpop.f32.mrb[0].mxu0
    %v1856 = vadd.f32 0.0, %v1855
    %v1857 = vpop.f32.mrb[0].mxu0
    %v1858 = vpop.f32.mrb[0].mxu0
    %v1859 = vadd.f32 0.0, %v1858
    %v1860 = vpop.f32.mrb[0].mxu0
    %1861 = vdwg.mxu0
    %v1866 = vcombine.high %v1848, %v1848
    %v1868 = vunpack.c.l.s4 1983009808
    %v1869 = vunpack.c.0.s8 %v1868
    %v1870 = vlaneseq
    %v1871 = vshrl.u32 %v1870, 7
    %v1872 = vsub.s32 %v1869, %v1871
    %v1873 = vrot.slane %v1848, %v1872
    %v1875 = vunpack.c.l.s4 1983009808
    %v1876 = vunpack.c.0.s8 %v1875
    %v1877 = vlaneseq
    %v1878 = vshrl.u32 %v1877, 7
    %v1879 = vsub.s32 %v1876, %v1878
    %v1880 = vrot.slane %v1866, %v1879
    %v1881 = vcombine.high %v1873, %v1873
    %v1882 = vcombine.high %v1880, %v1880
    %v1883 = vcombine.high %v1851, %v1851
    %v1885 = vunpack.c.l.s4 1983009808
    %v1886 = vunpack.c.0.s8 %v1885
    %v1887 = vlaneseq
    %v1888 = vshrl.u32 %v1887, 7
    %v1889 = vsub.s32 %v1886, %v1888
    %v1890 = vrot.slane %v1851, %v1889
    %v1892 = vunpack.c.l.s4 1983009808
    %v1893 = vunpack.c.0.s8 %v1892
    %v1894 = vlaneseq
    %v1895 = vshrl.u32 %v1894, 7
    %v1896 = vsub.s32 %v1893, %v1895
    %v1897 = vrot.slane %v1883, %v1896
    %v1898 = vcombine.high %v1890, %v1890
    %v1899 = vcombine.high %v1897, %v1897
    %v1900 = vcombine.high %v1856, %v1856
    %v1902 = vunpack.c.l.s4 1983009808
    %v1903 = vunpack.c.0.s8 %v1902
    %v1904 = vlaneseq
    %v1905 = vshrl.u32 %v1904, 7
    %v1906 = vsub.s32 %v1903, %v1905
    %v1907 = vrot.slane %v1856, %v1906
    %v1909 = vunpack.c.l.s4 1983009808
    %v1910 = vunpack.c.0.s8 %v1909
    %v1911 = vlaneseq
    %v1912 = vshrl.u32 %v1911, 7
    %v1913 = vsub.s32 %v1910, %v1912
    %v1914 = vrot.slane %v1900, %v1913
    %v1915 = vcombine.high %v1907, %v1907
    %v1916 = vcombine.high %v1914, %v1914
    %v1918 = vunpack.c.l.s4 1983009808
    %v1919 = vunpack.c.0.s8 %v1918
    %v1920 = vlaneseq
    %v1921 = vshrl.u32 %v1920, 7
    %v1922 = vsub.s32 %v1919, %v1921
    %v1923 = vrot.slane %v1859, %v1922
    %v1924 = vcombine.high %v1923, %v1923
    %v1939 = vadd.f32 %v1551, %v1873
    %v1940 = vadd.f32 %v1552, %v1881
    %v1941 = vadd.f32 %v1553, %v1880
    %v1942 = vadd.f32 %v1554, %v1882
    %v1943 = vadd.f32 %v1555, %v1890
    %v1944 = vadd.f32 %v1556, %v1898
    %v1945 = vadd.f32 %v1557, %v1897
    %v1946 = vadd.f32 %v1558, %v1899
    %v1947 = vadd.f32 %v1559, %v1907
    %v1948 = vadd.f32 %v1560, %v1915
    %v1949 = vadd.f32 %v1561, %v1914
    %v1950 = vadd.f32 %v1562, %v1916
    %v1951 = vadd.f32 %v1563, %v1923
    %v1952 = vadd.f32 %v1564, %v1924
    %v1953 = vld [vmem:[%s2] sm:$0xff]
    %v1954 = vld [vmem:[%s2 + $0x8] sm:$0x3f]
    %v1957 = vcombine.high %v1953, %v1953
    %v1959 = vunpack.c.l.s4 1983009808
    %v1960 = vunpack.c.0.s8 %v1959
    %v1961 = vlaneseq
    %v1962 = vshrl.u32 %v1961, 7
    %v1963 = vsub.s32 %v1960, %v1962
    %v1964 = vrot.slane %v1953, %v1963
    %v1966 = vunpack.c.l.s4 1983009808
    %v1967 = vunpack.c.0.s8 %v1966
    %v1968 = vlaneseq
    %v1969 = vshrl.u32 %v1968, 7
    %v1970 = vsub.s32 %v1967, %v1969
    %v1971 = vrot.slane %v1957, %v1970
    %v1972 = vcombine.high %v1964, %v1964
    %v1973 = vcombine.high %v1971, %v1971
    %v1974 = vcombine.high %v1954, %v1954
    %v1976 = vunpack.c.l.s4 1983009808
    %v1977 = vunpack.c.0.s8 %v1976
    %v1978 = vlaneseq
    %v1979 = vshrl.u32 %v1978, 7
    %v1980 = vsub.s32 %v1977, %v1979
    %v1981 = vrot.slane %v1954, %v1980
    %v1983 = vunpack.c.l.s4 1983009808
    %v1984 = vunpack.c.0.s8 %v1983
    %v1985 = vlaneseq
    %v1986 = vshrl.u32 %v1985, 7
    %v1987 = vsub.s32 %v1984, %v1986
    %v1988 = vrot.slane %v1974, %v1987
    %v1989 = vcombine.high %v1981, %v1981
    %v1997 = vadd.f32 %v1939, %v1964
    %v1998 = vadd.f32 %v1940, %v1972
    %v1999 = vadd.f32 %v1941, %v1971
    %v2000 = vadd.f32 %v1942, %v1973
    %v2001 = vadd.f32 %v1943, %v1981
    %v2002 = vadd.f32 %v1944, %v1989
    %v2003 = vadd.f32 %v1945, %v1988
    %v2004 = vadd.f32 %v1946, %v1964
    %v2005 = vadd.f32 %v1947, %v1972
    %v2006 = vadd.f32 %v1948, %v1971
    %v2007 = vadd.f32 %v1949, %v1973
    %v2008 = vadd.f32 %v1950, %v1981
    %v2009 = vadd.f32 %v1951, %v1989
    %v2010 = vadd.f32 %v1952, %v1988
    %v2025 = vcombine.low %v1997, %v1998
    %v2026 = vcombine.low %v1999, %v2000
    %v2028 = vunpack.c.l.s4 1983009808
    %v2029 = vunpack.c.0.s8 %v2028
    %v2030 = vlaneseq
    %v2031 = vshrl.u32 %v2030, 7
    %v2032 = vsub.s32 %v2029, %v2031
    %v2033 = vrot.slane %v2025, %v2032
    %v2035 = vunpack.c.l.s4 1983009808
    %v2036 = vunpack.c.0.s8 %v2035
    %v2037 = vlaneseq
    %v2038 = vshrl.u32 %v2037, 7
    %v2039 = vsub.s32 %v2036, %v2038
    %v2040 = vrot.slane %v2026, %v2039
    %v2041 = vcombine.low %v2033, %v2040
    %v2042 = vcombine.low %v2001, %v2002
    %v2044 = vunpack.c.l.s4 1983009808
    %v2045 = vunpack.c.0.s8 %v2044
    %v2046 = vlaneseq
    %v2047 = vshrl.u32 %v2046, 7
    %v2048 = vsub.s32 %v2045, %v2047
    %v2049 = vrot.slane %v2042, %v2048
    %v2051 = vunpack.c.l.s4 1983009808
    %v2052 = vunpack.c.0.s8 %v2051
    %v2053 = vlaneseq
    %v2054 = vshrl.u32 %v2053, 7
    %v2055 = vsub.s32 %v2052, %v2054
    %v2056 = vrot.slane %v2003, %v2055
    %v2057 = vcombine.low %v2049, %v2056
    %v2058 = vcombine.low %v2004, %v2005
    %v2059 = vcombine.low %v2006, %v2007
    %v2061 = vunpack.c.l.s4 1983009808
    %v2062 = vunpack.c.0.s8 %v2061
    %v2063 = vlaneseq
    %v2064 = vshrl.u32 %v2063, 7
    %v2065 = vsub.s32 %v2062, %v2064
    %v2066 = vrot.slane %v2058, %v2065
    %v2068 = vunpack.c.l.s4 1983009808
    %v2069 = vunpack.c.0.s8 %v2068
    %v2070 = vlaneseq
    %v2071 = vshrl.u32 %v2070, 7
    %v2072 = vsub.s32 %v2069, %v2071
    %v2073 = vrot.slane %v2059, %v2072
    %v2074 = vcombine.low %v2066, %v2073
    %v2075 = vcombine.low %v2008, %v2009
    %v2077 = vunpack.c.l.s4 1983009808
    %v2078 = vunpack.c.0.s8 %v2077
    %v2079 = vlaneseq
    %v2080 = vshrl.u32 %v2079, 7
    %v2081 = vsub.s32 %v2078, %v2080
    %v2082 = vrot.slane %v2075, %v2081
    %v2084 = vunpack.c.l.s4 1983009808
    %v2085 = vunpack.c.0.s8 %v2084
    %v2086 = vlaneseq
    %v2087 = vshrl.u32 %v2086, 7
    %v2088 = vsub.s32 %v2085, %v2087
    %v2089 = vrot.slane %v2010, %v2088
    %v2090 = vcombine.low %v2082, %v2089
    %vm2095 = vcmask 195584
    %v2096 = vsel %vm2095, %v2041, -inf
    %vm2097 = vcmask 193536
    %v2098 = vsel %vm2097, %v2057, -inf
    %v2099 = vmax.f32 %v2096, %v2098
    %v2100 = vrot.slane %v2099, 4
    %v2101 = vmax.f32 %v2099, %v2100
    %v2102 = vrot.slane %v2101, 2
    %v2103 = vmax.f32 %v2101, %v2102
    %v2104 = vrot.slane %v2103, 1
    %v2105 = vmax.f32 %v2103, %v2104
    %v2106 = vsel %vm2095, %v2074, -inf
    %v2107 = vsel %vm2097, %v2090, -inf
    %v2108 = vmax.f32 %v2106, %v2107
    %v2109 = vrot.slane %v2108, 4
    %v2110 = vmax.f32 %v2108, %v2109
    %v2111 = vrot.slane %v2110, 2
    %v2112 = vmax.f32 %v2110, %v2111
    %v2113 = vrot.slane %v2112, 1
    %v2114 = vmax.f32 %v2112, %v2113
    %v2115 = vld [vmem:[%s3] sm:$0x1]
    %v2117 = vlaneseq
    %v2118 = vshrl.u32 %v2117, 7
    %v2119 = vsub.s32 0, %v2118
    %v2120 = vrot.slane %v2115, %v2119
    %v2122 = vadd.f32 %v2105, %v2120
    %v2123 = vadd.f32 %v2114, %v2120
    %v2124 = vmax.f32 %v2122, 0.0
    %v2125 = vmax.f32 %v2123, 0.0
    %v2126 = vpack.c.bf16 %v2124, %v2124
    %v2127 = vpack.c.bf16 %v2125, %v2125
    %v2128 = vld [vmem:[%s4] sm:$0xf]
    %v2129 = vld [vmem:[%s4 + $0x4] sm:$0xf]
    %v2130 = vld [vmem:[%s4 + $0x8] sm:$0xf]
    %v2131 = vld [vmem:[%s5] sm:$0x1]
    %v2133 = vlaneseq
    %v2134 = vshrl.u32 %v2133, 7
    %v2135 = vsub.s32 0, %v2134
    %v2136 = vrot.slane %v2131, %v2135
    %v2140 = vunpack.c.l.b16 %v2126
    %v2141 = vunpack.c.l.b16 %v2127
    %v2142 = vrot.slane %v2141, 7
    %vm2143 = vcmask 1041409
    %v2144 = vsel %vm2143, %v2142, %v2140
    %v2145 = vpack.c.b16 %v2144, %v2144
    %v2149 = vunpack.c.l.b16 %v2128
    %v2150 = vunpack.c.l.b16 %v2129
    %v2151 = vunpack.c.l.b16 %v2130
    %v2152 = vpack.c.b16 %v2150, %v2149
    %v2153 = vpack.c.b16 %v2151, %v2151
    %v2156 = vsel %vm2095, %v2145, 0
    %vm2158 = vcmask 1043456
    %v2160 = vsel %vm2158, %v2153, 0
    %2162 = vmatprep.subr.bf16.mxu0 0
    %2163 = vmatpush1.bf16.msra.mxu0 %v2152
    %2164 = vmatprep.subr.bf16.mxu0 0
    %2165 = vmatpush1.bf16.msra.mxu0 %v2160
    %2166 = vmatprep.subr.bf16.mxu0 0
    %2167 = vmatpush1.bf16.msra.mxu0 0
    %2168 = vmatprep.subr.bf16.mxu0 0
    %2169 = vmatpush1.bf16.msra.mxu0 0
    %2170 = vmatprep.subr.bf16.mxu0 0
    %2171 = vmatpush1.bf16.msra.mxu0 0
    %2172 = vmatprep.subr.bf16.mxu0 0
    %2173 = vmatpush1.bf16.msra.mxu0 0
    %2174 = vmatprep.subr.bf16.mxu0 0
    %2175 = vmatpush1.bf16.msra.mxu0 0
    %2176 = vmatprep.subr.bf16.mxu0 0
    %2177 = vmatpush1.bf16.msra.mxu0 0
    %2178 = vmatprep.subr.bf16.mxu0 0
    %2179 = vmatpush1.bf16.msra.mxu0 0
    %2180 = vmatprep.subr.bf16.mxu0 0
    %2181 = vmatpush1.bf16.msra.mxu0 0
    %2182 = vmatprep.subr.bf16.mxu0 0
    %2183 = vmatpush1.bf16.msra.mxu0 0
    %2184 = vmatprep.subr.bf16.mxu0 0
    %2185 = vmatpush1.bf16.msra.mxu0 0
    %2186 = vmatprep.subr.bf16.mxu0 0
    %2187 = vmatpush1.bf16.msra.mxu0 0
    %2188 = vmatprep.subr.bf16.mxu0 0
    %2189 = vmatpush1.bf16.msra.mxu0 0
    %2190 = vmatprep.subr.bf16.mxu0 0
    %2191 = vmatpush1.bf16.msra.mxu0 0
    %2192 = vmatprep.subr.bf16.mxu0 0
    %2193 = vmatpush1.bf16.msra.mxu0 0
    %2194 = vmatprep.mubr.bf16.mxu0 0
    %2195 = vmatmul.mubr.bf16.gmra.mrb[0].mxu0 %v2156
    %v2196 = vpop.f32.mrb[0].mxu0
    %v2197 = vadd.f32 %v2136, %v2196
    %v2198 = vpop.f32.mrb[0].mxu0
    %v2199 = vpop.f32.mrb[0].mxu0
    %v2200 = vpop.f32.mrb[0].mxu0
    %2201 = vdwg.mxu0
    %vm2202 = vcmask 156672
    %2203 = vst.msk [vmem:[#allocation2] sm:$0x3] %vm2202, %v2197
    // Predicated region
    $region26: #{tpu_custom_call.1} parent=1 // pred_check
      _
    $region27: #{tpu_custom_call.1} parent=1 // pred_check_branch
      %2205 = sbr.rel (0) target = $region29
    $region28: #{tpu_custom_call.1} parent=1 // pred_region
      %s2207 = ssub.s32 32, 32
      %2208 = vsyncadd [#allocation3], %s2207
      %s2210 = sshll.u32 [#allocation2], 4
      %s2211 = int_to_ptr.vmem [resolvable:$true] %s2210
      %2213 = dma.vmem_to_hbm [thread:$0]  %s2211, 32, %s6, [#allocation3]
    $region29: #{tpu_custom_call.1} parent=1 // pred_fallthru
      _
    // Predicated region
    $region30: #{tpu_custom_call.1} parent=1 // pred_check
      _
    $region31: #{tpu_custom_call.1} parent=1 // pred_check_branch
      %2215 = sbr.rel (0) target = $region33
    $region32: #{tpu_custom_call.1} parent=1 // pred_region
      %2216 = dma.done [#allocation3], 32
    $region33: #{tpu_custom_call.1} parent=1 // pred_fallthru
      _
    %2217 = vsyncpa [#allocation3], 1

</llo_original>
